<compile_context>
chip_gen: v7x
topology: tpu7x:2x2x1
jax: 0.10.0
libtpu: 0.0.40
codegen_flags: <defaults>
</compile_context>

<pallas_src>
import functools

import jax
import jax.numpy as jnp
from jax.experimental import pallas as pl
from jax.experimental.pallas import tpu as pltpu

# ---- module hyperparameters (from modurnn.py) -------------------------------
HIDDEN_SIZE = 128
INPUT_SIZE = 2
NUM_CLASSES = 10
NUM_LAYERS = 1   # kernel below implements the single-layer case


# ---- Pallas kernel -----------------------------------------------------------
def lstm_fc_kernel(x_ref, wih_ref, whh_ref, b_ref, wfc_ref, bfc_ref, out_ref,
                   *, batch, seq_len, hidden):
    """Single grid point: whole (small) problem resident in VMEM.

    x_ref   : (B*T, I)  flattened batch-major input (row index = b*T + t)
    wih_ref : (I, 4H)   input->gates weight (transposed w.r.t. PyTorch)
    whh_ref : (H, 4H)   hidden->gates weight (transposed; f32 or bf16)
    b_ref   : (1, 4H)   combined bias (b_ih + b_hh)
    wfc_ref : (H, C)    fc weight (transposed)
    bfc_ref : (1, C)    fc bias
    out_ref : (B, C)    logits for the last timestep
    """
    B, T, H = batch, seq_len, hidden

    # Hoisted input projection + bias: one matmul covers all timesteps and the
    # bias add, removing T-1 tiny MXU ops and the per-step bias broadcast from
    # the serial critical path.
    xg = (jnp.dot(x_ref[...], wih_ref[...], preferred_element_type=jnp.float32)
          + b_ref[...])                       # (B*T, 4H)
    xg = xg.reshape(B, T, 4 * H)              # row b*T+t -> [b, t]

    # Hoist the recurrent weight read out of the loop (single VMEM read).
    whh = whh_ref[...]                        # (H, 4H)

    # Recurrent state lives in vregs (loop-carried values), not VMEM scratch.
    h = jnp.zeros((B, H), jnp.float32)
    c = jnp.zeros((B, H), jnp.float32)

    # T is small and static -> fully unrolled recurrence.
    for t in range(T):
        gates = xg[:, t, :] + jnp.dot(h.astype(whh.dtype), whh,
                                      preferred_element_type=jnp.float32)
        # PyTorch LSTM gate order: i, f, g, o  (gate math kept in f32).
        i = jax.nn.sigmoid(gates[:, 0 * H:1 * H])
        f = jax.nn.sigmoid(gates[:, 1 * H:2 * H])
        g = jnp.tanh(gates[:, 2 * H:3 * H])
        o = jax.nn.sigmoid(gates[:, 3 * H:4 * H])
        c = f * c + i * g
        h = o * jnp.tanh(c)

    # fc(out[:, -1, :])
    out_ref[...] = (jnp.dot(h, wfc_ref[...], preferred_element_type=jnp.float32)
                    + bfc_ref[...])


# ---- wrapper ----------------------------------------------------------------
def rnn_forward(x, params, *, bf16_recurrence=False):
    """x: (B, T, I) float32. Returns logits (B, NUM_CLASSES).

    bf16_recurrence=True casts W_hh to bf16 (v6e/v7x native-bf16 MXU fast
    path); accumulation stays f32.  Default False preserves exact f32
    semantics of the PyTorch module (and is the right choice on v5e).
    """
    B, T, I = x.shape
    H = params["whh_t"].shape[0]
    C = params["wfc_t"].shape[1]

    whh = params["whh_t"]
    if bf16_recurrence:
        whh = whh.astype(jnp.bfloat16)

    # Free reshape of the contiguous (B, T, I) array -- no HBM transpose pass.
    x_flat = x.reshape(B * T, I)

    kernel = functools.partial(lstm_fc_kernel, batch=B, seq_len=T, hidden=H)
    vmem = pl.BlockSpec(memory_space=pltpu.MemorySpace.VMEM)

    # NOTE: everything here fits trivially in VMEM on all generations (incl.
    # v7x's 64 MiB).  If T or B grow large, switch to a grid over T-chunks
    # (h/c resident across an "arbitrary" axis) or memory_space=pl.ANY with
    # manual double-buffered DMA; a leading batch grid axis marked "parallel"
    # would additionally use both v7x TensorCores for large-batch inference.
    return pl.pallas_call(
        kernel,
        out_shape=jax.ShapeDtypeStruct((B, C), jnp.float32),
        in_specs=[vmem] * 6,
        out_specs=vmem,
    )(
        x_flat,
        params["wih_t"],
        whh,
        params["b"],
        params["wfc_t"],
        params["bfc"],
    )


# ---- deterministic parameter init (shapes match nn.LSTM / nn.Linear) --------
def init_params(key, input_size, hidden_size, num_classes):
    k = 1.0 / jnp.sqrt(hidden_size)
    keys = jax.random.split(key, 6)
    # PyTorch shapes: weight_ih (4H, I), weight_hh (4H, H), biases (4H,)
    w_ih = jax.random.uniform(keys[0], (4 * hidden_size, input_size),
                              jnp.float32, -k, k)
    w_hh = jax.random.uniform(keys[1], (4 * hidden_size, hidden_size),
                              jnp.float32, -k, k)
    b_ih = jax.random.uniform(keys[2], (4 * hidden_size,), jnp.float32, -k, k)
    b_hh = jax.random.uniform(keys[3], (4 * hidden_size,), jnp.float32, -k, k)
    # fc: weight (C, H), bias (C,)
    kf = 1.0 / jnp.sqrt(hidden_size)
    w_fc = jax.random.uniform(keys[4], (num_classes, hidden_size),
                              jnp.float32, -kf, kf)
    b_fc = jax.random.uniform(keys[5], (num_classes,), jnp.float32, -kf, kf)

    return {
        "wih_t": w_ih.T,                            # (I, 4H)
        "whh_t": w_hh.T,                            # (H, 4H)
        "b": (b_ih + b_hh)[None, :],                # (1, 4H)
        "wfc_t": w_fc.T,                            # (H, C)
        "bfc": b_fc[None, :],                       # (1, C)
    }


# ---- pure-JAX reference (for correctness check) ------------------------------
def rnn_forward_ref(x, params):
    B, T, I = x.shape
    H = params["whh_t"].shape[0]
    h = jnp.zeros((B, H), jnp.float32)
    c = jnp.zeros((B, H), jnp.float32)
    for t in range(T):
        gates = x[:, t, :] @ params["wih_t"] + h @ params["whh_t"] + params["b"]
        i = jax.nn.sigmoid(gates[:, 0 * H:1 * H])
        f = jax.nn.sigmoid(gates[:, 1 * H:2 * H])
        g = jnp.tanh(gates[:, 2 * H:3 * H])
        o = jax.nn.sigmoid(gates[:, 3 * H:4 * H])
        c = f * c + i * g
        h = o * jnp.tanh(c)
    return h @ params["wfc_t"] + params["bfc"]


if __name__ == "__main__":
    key = jax.random.PRNGKey(0)
    pkey, xkey = jax.random.split(key)

    B, T = 2, 8
    params = init_params(pkey, INPUT_SIZE, HIDDEN_SIZE, NUM_CLASSES)
    x = jax.random.normal(xkey, (B, T, INPUT_SIZE), jnp.float32)

    ref = rnn_forward_ref(x, params)

    # Exact-semantics (f32) path: must match the PyTorch-equivalent reference.
    out = jax.block_until_ready(rnn_forward(x, params))
    assert out.shape == (B, NUM_CLASSES)
    assert jnp.allclose(out, ref, rtol=1e-5, atol=1e-5), "f32 mismatch vs reference"

    # bf16-recurrence fast path (v6e/v7x): same kernel, looser tolerance.
    out_bf16 = jax.block_until_ready(rnn_forward(x, params, bf16_recurrence=True))
    assert out_bf16.shape == (B, NUM_CLASSES)
    assert jnp.allclose(out_bf16, ref, rtol=0.0, atol=5e-2), "bf16 path mismatch"

    print("KERNEL_OK")
</pallas_src>

<mosaic_0001>
module attributes {stable_mosaic.version = 11 : i64} {
  func.func @lstm_fc_kernel(%arg0: memref<16x2xf32, #tpu.memory_space<vmem>>, %arg1: memref<2x512xf32, #tpu.memory_space<vmem>>, %arg2: memref<128x512xf32, #tpu.memory_space<vmem>>, %arg3: memref<1x512xf32, #tpu.memory_space<vmem>>, %arg4: memref<128x10xf32, #tpu.memory_space<vmem>>, %arg5: memref<1x10xf32, #tpu.memory_space<vmem>>, %arg6: memref<2x10xf32, #tpu.memory_space<vmem>>) attributes {dimension_semantics = [], scalar_prefetch = 0 : i64, scratch_operands = 0 : i64, tpu.core_type = #tpu.core_type<tc>} {
    %c0 = arith.constant 0 : index
    %c0_0 = arith.constant 0 : index
    %0 = vector.load %arg0[%c0, %c0_0] : memref<16x2xf32, #tpu.memory_space<vmem>>, vector<16x2xf32>
    %c0_1 = arith.constant 0 : index
    %c0_2 = arith.constant 0 : index
    %1 = vector.load %arg1[%c0_1, %c0_2] : memref<2x512xf32, #tpu.memory_space<vmem>>, vector<2x512xf32>
    %cst = arith.constant dense<0.000000e+00> : vector<16x512xf32>
    %2 = tpu.matmul %0, %1, %cst {dimension_numbers = #tpu.dot_dimension_numbers<[1], [0], [0], [1], [0, 0, 1, 1], [], []>} : vector<16x2xf32>, vector<2x512xf32>, vector<16x512xf32> -> vector<16x512xf32>
    %c0_3 = arith.constant 0 : index
    %c0_4 = arith.constant 0 : index
    %3 = vector.load %arg3[%c0_3, %c0_4] : memref<1x512xf32, #tpu.memory_space<vmem>>, vector<1x512xf32>
    %4 = vector.broadcast %3 : vector<1x512xf32> to vector<16x512xf32>
    %5 = arith.addf %2, %4 : vector<16x512xf32>
    %6 = vector.shape_cast %5 : vector<16x512xf32> to vector<2x8x512xf32>
    %c0_5 = arith.constant 0 : index
    %c0_6 = arith.constant 0 : index
    %7 = vector.load %arg2[%c0_5, %c0_6] : memref<128x512xf32, #tpu.memory_space<vmem>>, vector<128x512xf32>
    %cst_7 = arith.constant 0.000000e+00 : f32
    %8 = vector.broadcast %cst_7 : f32 to vector<2x128xf32>
    %cst_8 = arith.constant 0.000000e+00 : f32
    %9 = vector.broadcast %cst_8 : f32 to vector<2x128xf32>
    %10 = vector.extract_strided_slice %6 {offsets = [0, 0, 0], sizes = [2, 1, 512], strides = [1, 1, 1]} : vector<2x8x512xf32> to vector<2x1x512xf32>
    %11 = vector.shape_cast %10 : vector<2x1x512xf32> to vector<2x512xf32>
    %cst_9 = arith.constant dense<0.000000e+00> : vector<2x512xf32>
    %12 = tpu.matmul %8, %7, %cst_9 {dimension_numbers = #tpu.dot_dimension_numbers<[1], [0], [0], [1], [0, 0, 1, 1], [], []>} : vector<2x128xf32>, vector<128x512xf32>, vector<2x512xf32> -> vector<2x512xf32>
    %13 = arith.addf %11, %12 : vector<2x512xf32>
    %14 = vector.extract_strided_slice %13 {offsets = [0, 0], sizes = [2, 128], strides = [1, 1]} : vector<2x512xf32> to vector<2x128xf32>
    %15 = arith.negf %14 : vector<2x128xf32>
    %16 = math.exp %15 : vector<2x128xf32>
    %cst_10 = arith.constant 1.000000e+00 : f32
    %17 = vector.broadcast %cst_10 : f32 to vector<2x128xf32>
    %18 = arith.addf %17, %16 : vector<2x128xf32>
    %19 = arith.divf %17, %18 : vector<2x128xf32>
    %20 = vector.extract_strided_slice %13 {offsets = [0, 128], sizes = [2, 128], strides = [1, 1]} : vector<2x512xf32> to vector<2x128xf32>
    %21 = arith.negf %20 : vector<2x128xf32>
    %22 = math.exp %21 : vector<2x128xf32>
    %cst_11 = arith.constant 1.000000e+00 : f32
    %23 = vector.broadcast %cst_11 : f32 to vector<2x128xf32>
    %24 = arith.addf %23, %22 : vector<2x128xf32>
    %25 = arith.divf %23, %24 : vector<2x128xf32>
    %26 = vector.extract_strided_slice %13 {offsets = [0, 256], sizes = [2, 128], strides = [1, 1]} : vector<2x512xf32> to vector<2x128xf32>
    %27 = math.tanh %26 : vector<2x128xf32>
    %28 = vector.extract_strided_slice %13 {offsets = [0, 384], sizes = [2, 128], strides = [1, 1]} : vector<2x512xf32> to vector<2x128xf32>
    %29 = arith.negf %28 : vector<2x128xf32>
    %30 = math.exp %29 : vector<2x128xf32>
    %cst_12 = arith.constant 1.000000e+00 : f32
    %31 = vector.broadcast %cst_12 : f32 to vector<2x128xf32>
    %32 = arith.addf %31, %30 : vector<2x128xf32>
    %33 = arith.divf %31, %32 : vector<2x128xf32>
    %34 = arith.mulf %25, %9 : vector<2x128xf32>
    %35 = arith.mulf %19, %27 : vector<2x128xf32>
    %36 = arith.addf %34, %35 : vector<2x128xf32>
    %37 = math.tanh %36 : vector<2x128xf32>
    %38 = arith.mulf %33, %37 : vector<2x128xf32>
    %39 = vector.extract_strided_slice %6 {offsets = [0, 1, 0], sizes = [2, 1, 512], strides = [1, 1, 1]} : vector<2x8x512xf32> to vector<2x1x512xf32>
    %40 = vector.shape_cast %39 : vector<2x1x512xf32> to vector<2x512xf32>
    %cst_13 = arith.constant dense<0.000000e+00> : vector<2x512xf32>
    %41 = tpu.matmul %38, %7, %cst_13 {dimension_numbers = #tpu.dot_dimension_numbers<[1], [0], [0], [1], [0, 0, 1, 1], [], []>} : vector<2x128xf32>, vector<128x512xf32>, vector<2x512xf32> -> vector<2x512xf32>
    %42 = arith.addf %40, %41 : vector<2x512xf32>
    %43 = vector.extract_strided_slice %42 {offsets = [0, 0], sizes = [2, 128], strides = [1, 1]} : vector<2x512xf32> to vector<2x128xf32>
    %44 = arith.negf %43 : vector<2x128xf32>
    %45 = math.exp %44 : vector<2x128xf32>
    %cst_14 = arith.constant 1.000000e+00 : f32
    %46 = vector.broadcast %cst_14 : f32 to vector<2x128xf32>
    %47 = arith.addf %46, %45 : vector<2x128xf32>
    %48 = arith.divf %46, %47 : vector<2x128xf32>
    %49 = vector.extract_strided_slice %42 {offsets = [0, 128], sizes = [2, 128], strides = [1, 1]} : vector<2x512xf32> to vector<2x128xf32>
    %50 = arith.negf %49 : vector<2x128xf32>
    %51 = math.exp %50 : vector<2x128xf32>
    %cst_15 = arith.constant 1.000000e+00 : f32
    %52 = vector.broadcast %cst_15 : f32 to vector<2x128xf32>
    %53 = arith.addf %52, %51 : vector<2x128xf32>
    %54 = arith.divf %52, %53 : vector<2x128xf32>
    %55 = vector.extract_strided_slice %42 {offsets = [0, 256], sizes = [2, 128], strides = [1, 1]} : vector<2x512xf32> to vector<2x128xf32>
    %56 = math.tanh %55 : vector<2x128xf32>
    %57 = vector.extract_strided_slice %42 {offsets = [0, 384], sizes = [2, 128], strides = [1, 1]} : vector<2x512xf32> to vector<2x128xf32>
    %58 = arith.negf %57 : vector<2x128xf32>
    %59 = math.exp %58 : vector<2x128xf32>
    %cst_16 = arith.constant 1.000000e+00 : f32
    %60 = vector.broadcast %cst_16 : f32 to vector<2x128xf32>
    %61 = arith.addf %60, %59 : vector<2x128xf32>
    %62 = arith.divf %60, %61 : vector<2x128xf32>
    %63 = arith.mulf %54, %36 : vector<2x128xf32>
    %64 = arith.mulf %48, %56 : vector<2x128xf32>
    %65 = arith.addf %63, %64 : vector<2x128xf32>
    %66 = math.tanh %65 : vector<2x128xf32>
    %67 = arith.mulf %62, %66 : vector<2x128xf32>
    %68 = vector.extract_strided_slice %6 {offsets = [0, 2, 0], sizes = [2, 1, 512], strides = [1, 1, 1]} : vector<2x8x512xf32> to vector<2x1x512xf32>
    %69 = vector.shape_cast %68 : vector<2x1x512xf32> to vector<2x512xf32>
    %cst_17 = arith.constant dense<0.000000e+00> : vector<2x512xf32>
    %70 = tpu.matmul %67, %7, %cst_17 {dimension_numbers = #tpu.dot_dimension_numbers<[1], [0], [0], [1], [0, 0, 1, 1], [], []>} : vector<2x128xf32>, vector<128x512xf32>, vector<2x512xf32> -> vector<2x512xf32>
    %71 = arith.addf %69, %70 : vector<2x512xf32>
    %72 = vector.extract_strided_slice %71 {offsets = [0, 0], sizes = [2, 128], strides = [1, 1]} : vector<2x512xf32> to vector<2x128xf32>
    %73 = arith.negf %72 : vector<2x128xf32>
    %74 = math.exp %73 : vector<2x128xf32>
    %cst_18 = arith.constant 1.000000e+00 : f32
    %75 = vector.broadcast %cst_18 : f32 to vector<2x128xf32>
    %76 = arith.addf %75, %74 : vector<2x128xf32>
    %77 = arith.divf %75, %76 : vector<2x128xf32>
    %78 = vector.extract_strided_slice %71 {offsets = [0, 128], sizes = [2, 128], strides = [1, 1]} : vector<2x512xf32> to vector<2x128xf32>
    %79 = arith.negf %78 : vector<2x128xf32>
    %80 = math.exp %79 : vector<2x128xf32>
    %cst_19 = arith.constant 1.000000e+00 : f32
    %81 = vector.broadcast %cst_19 : f32 to vector<2x128xf32>
    %82 = arith.addf %81, %80 : vector<2x128xf32>
    %83 = arith.divf %81, %82 : vector<2x128xf32>
    %84 = vector.extract_strided_slice %71 {offsets = [0, 256], sizes = [2, 128], strides = [1, 1]} : vector<2x512xf32> to vector<2x128xf32>
    %85 = math.tanh %84 : vector<2x128xf32>
    %86 = vector.extract_strided_slice %71 {offsets = [0, 384], sizes = [2, 128], strides = [1, 1]} : vector<2x512xf32> to vector<2x128xf32>
    %87 = arith.negf %86 : vector<2x128xf32>
    %88 = math.exp %87 : vector<2x128xf32>
    %cst_20 = arith.constant 1.000000e+00 : f32
    %89 = vector.broadcast %cst_20 : f32 to vector<2x128xf32>
    %90 = arith.addf %89, %88 : vector<2x128xf32>
    %91 = arith.divf %89, %90 : vector<2x128xf32>
    %92 = arith.mulf %83, %65 : vector<2x128xf32>
    %93 = arith.mulf %77, %85 : vector<2x128xf32>
    %94 = arith.addf %92, %93 : vector<2x128xf32>
    %95 = math.tanh %94 : vector<2x128xf32>
    %96 = arith.mulf %91, %95 : vector<2x128xf32>
    %97 = vector.extract_strided_slice %6 {offsets = [0, 3, 0], sizes = [2, 1, 512], strides = [1, 1, 1]} : vector<2x8x512xf32> to vector<2x1x512xf32>
    %98 = vector.shape_cast %97 : vector<2x1x512xf32> to vector<2x512xf32>
    %cst_21 = arith.constant dense<0.000000e+00> : vector<2x512xf32>
    %99 = tpu.matmul %96, %7, %cst_21 {dimension_numbers = #tpu.dot_dimension_numbers<[1], [0], [0], [1], [0, 0, 1, 1], [], []>} : vector<2x128xf32>, vector<128x512xf32>, vector<2x512xf32> -> vector<2x512xf32>
    %100 = arith.addf %98, %99 : vector<2x512xf32>
    %101 = vector.extract_strided_slice %100 {offsets = [0, 0], sizes = [2, 128], strides = [1, 1]} : vector<2x512xf32> to vector<2x128xf32>
    %102 = arith.negf %101 : vector<2x128xf32>
    %103 = math.exp %102 : vector<2x128xf32>
    %cst_22 = arith.constant 1.000000e+00 : f32
    %104 = vector.broadcast %cst_22 : f32 to vector<2x128xf32>
    %105 = arith.addf %104, %103 : vector<2x128xf32>
    %106 = arith.divf %104, %105 : vector<2x128xf32>
    %107 = vector.extract_strided_slice %100 {offsets = [0, 128], sizes = [2, 128], strides = [1, 1]} : vector<2x512xf32> to vector<2x128xf32>
    %108 = arith.negf %107 : vector<2x128xf32>
    %109 = math.exp %108 : vector<2x128xf32>
    %cst_23 = arith.constant 1.000000e+00 : f32
    %110 = vector.broadcast %cst_23 : f32 to vector<2x128xf32>
    %111 = arith.addf %110, %109 : vector<2x128xf32>
    %112 = arith.divf %110, %111 : vector<2x128xf32>
    %113 = vector.extract_strided_slice %100 {offsets = [0, 256], sizes = [2, 128], strides = [1, 1]} : vector<2x512xf32> to vector<2x128xf32>
    %114 = math.tanh %113 : vector<2x128xf32>
    %115 = vector.extract_strided_slice %100 {offsets = [0, 384], sizes = [2, 128], strides = [1, 1]} : vector<2x512xf32> to vector<2x128xf32>
    %116 = arith.negf %115 : vector<2x128xf32>
    %117 = math.exp %116 : vector<2x128xf32>
    %cst_24 = arith.constant 1.000000e+00 : f32
    %118 = vector.broadcast %cst_24 : f32 to vector<2x128xf32>
    %119 = arith.addf %118, %117 : vector<2x128xf32>
    %120 = arith.divf %118, %119 : vector<2x128xf32>
    %121 = arith.mulf %112, %94 : vector<2x128xf32>
    %122 = arith.mulf %106, %114 : vector<2x128xf32>
    %123 = arith.addf %121, %122 : vector<2x128xf32>
    %124 = math.tanh %123 : vector<2x128xf32>
    %125 = arith.mulf %120, %124 : vector<2x128xf32>
    %126 = vector.extract_strided_slice %6 {offsets = [0, 4, 0], sizes = [2, 1, 512], strides = [1, 1, 1]} : vector<2x8x512xf32> to vector<2x1x512xf32>
    %127 = vector.shape_cast %126 : vector<2x1x512xf32> to vector<2x512xf32>
    %cst_25 = arith.constant dense<0.000000e+00> : vector<2x512xf32>
    %128 = tpu.matmul %125, %7, %cst_25 {dimension_numbers = #tpu.dot_dimension_numbers<[1], [0], [0], [1], [0, 0, 1, 1], [], []>} : vector<2x128xf32>, vector<128x512xf32>, vector<2x512xf32> -> vector<2x512xf32>
    %129 = arith.addf %127, %128 : vector<2x512xf32>
    %130 = vector.extract_strided_slice %129 {offsets = [0, 0], sizes = [2, 128], strides = [1, 1]} : vector<2x512xf32> to vector<2x128xf32>
    %131 = arith.negf %130 : vector<2x128xf32>
    %132 = math.exp %131 : vector<2x128xf32>
    %cst_26 = arith.constant 1.000000e+00 : f32
    %133 = vector.broadcast %cst_26 : f32 to vector<2x128xf32>
    %134 = arith.addf %133, %132 : vector<2x128xf32>
    %135 = arith.divf %133, %134 : vector<2x128xf32>
    %136 = vector.extract_strided_slice %129 {offsets = [0, 128], sizes = [2, 128], strides = [1, 1]} : vector<2x512xf32> to vector<2x128xf32>
    %137 = arith.negf %136 : vector<2x128xf32>
    %138 = math.exp %137 : vector<2x128xf32>
    %cst_27 = arith.constant 1.000000e+00 : f32
    %139 = vector.broadcast %cst_27 : f32 to vector<2x128xf32>
    %140 = arith.addf %139, %138 : vector<2x128xf32>
    %141 = arith.divf %139, %140 : vector<2x128xf32>
    %142 = vector.extract_strided_slice %129 {offsets = [0, 256], sizes = [2, 128], strides = [1, 1]} : vector<2x512xf32> to vector<2x128xf32>
    %143 = math.tanh %142 : vector<2x128xf32>
    %144 = vector.extract_strided_slice %129 {offsets = [0, 384], sizes = [2, 128], strides = [1, 1]} : vector<2x512xf32> to vector<2x128xf32>
    %145 = arith.negf %144 : vector<2x128xf32>
    %146 = math.exp %145 : vector<2x128xf32>
    %cst_28 = arith.constant 1.000000e+00 : f32
    %147 = vector.broadcast %cst_28 : f32 to vector<2x128xf32>
    %148 = arith.addf %147, %146 : vector<2x128xf32>
    %149 = arith.divf %147, %148 : vector<2x128xf32>
    %150 = arith.mulf %141, %123 : vector<2x128xf32>
    %151 = arith.mulf %135, %143 : vector<2x128xf32>
    %152 = arith.addf %150, %151 : vector<2x128xf32>
    %153 = math.tanh %152 : vector<2x128xf32>
    %154 = arith.mulf %149, %153 : vector<2x128xf32>
    %155 = vector.extract_strided_slice %6 {offsets = [0, 5, 0], sizes = [2, 1, 512], strides = [1, 1, 1]} : vector<2x8x512xf32> to vector<2x1x512xf32>
    %156 = vector.shape_cast %155 : vector<2x1x512xf32> to vector<2x512xf32>
    %cst_29 = arith.constant dense<0.000000e+00> : vector<2x512xf32>
    %157 = tpu.matmul %154, %7, %cst_29 {dimension_numbers = #tpu.dot_dimension_numbers<[1], [0], [0], [1], [0, 0, 1, 1], [], []>} : vector<2x128xf32>, vector<128x512xf32>, vector<2x512xf32> -> vector<2x512xf32>
    %158 = arith.addf %156, %157 : vector<2x512xf32>
    %159 = vector.extract_strided_slice %158 {offsets = [0, 0], sizes = [2, 128], strides = [1, 1]} : vector<2x512xf32> to vector<2x128xf32>
    %160 = arith.negf %159 : vector<2x128xf32>
    %161 = math.exp %160 : vector<2x128xf32>
    %cst_30 = arith.constant 1.000000e+00 : f32
    %162 = vector.broadcast %cst_30 : f32 to vector<2x128xf32>
    %163 = arith.addf %162, %161 : vector<2x128xf32>
    %164 = arith.divf %162, %163 : vector<2x128xf32>
    %165 = vector.extract_strided_slice %158 {offsets = [0, 128], sizes = [2, 128], strides = [1, 1]} : vector<2x512xf32> to vector<2x128xf32>
    %166 = arith.negf %165 : vector<2x128xf32>
    %167 = math.exp %166 : vector<2x128xf32>
    %cst_31 = arith.constant 1.000000e+00 : f32
    %168 = vector.broadcast %cst_31 : f32 to vector<2x128xf32>
    %169 = arith.addf %168, %167 : vector<2x128xf32>
    %170 = arith.divf %168, %169 : vector<2x128xf32>
    %171 = vector.extract_strided_slice %158 {offsets = [0, 256], sizes = [2, 128], strides = [1, 1]} : vector<2x512xf32> to vector<2x128xf32>
    %172 = math.tanh %171 : vector<2x128xf32>
    %173 = vector.extract_strided_slice %158 {offsets = [0, 384], sizes = [2, 128], strides = [1, 1]} : vector<2x512xf32> to vector<2x128xf32>
    %174 = arith.negf %173 : vector<2x128xf32>
    %175 = math.exp %174 : vector<2x128xf32>
    %cst_32 = arith.constant 1.000000e+00 : f32
    %176 = vector.broadcast %cst_32 : f32 to vector<2x128xf32>
    %177 = arith.addf %176, %175 : vector<2x128xf32>
    %178 = arith.divf %176, %177 : vector<2x128xf32>
    %179 = arith.mulf %170, %152 : vector<2x128xf32>
    %180 = arith.mulf %164, %172 : vector<2x128xf32>
    %181 = arith.addf %179, %180 : vector<2x128xf32>
    %182 = math.tanh %181 : vector<2x128xf32>
    %183 = arith.mulf %178, %182 : vector<2x128xf32>
    %184 = vector.extract_strided_slice %6 {offsets = [0, 6, 0], sizes = [2, 1, 512], strides = [1, 1, 1]} : vector<2x8x512xf32> to vector<2x1x512xf32>
    %185 = vector.shape_cast %184 : vector<2x1x512xf32> to vector<2x512xf32>
    %cst_33 = arith.constant dense<0.000000e+00> : vector<2x512xf32>
    %186 = tpu.matmul %183, %7, %cst_33 {dimension_numbers = #tpu.dot_dimension_numbers<[1], [0], [0], [1], [0, 0, 1, 1], [], []>} : vector<2x128xf32>, vector<128x512xf32>, vector<2x512xf32> -> vector<2x512xf32>
    %187 = arith.addf %185, %186 : vector<2x512xf32>
    %188 = vector.extract_strided_slice %187 {offsets = [0, 0], sizes = [2, 128], strides = [1, 1]} : vector<2x512xf32> to vector<2x128xf32>
    %189 = arith.negf %188 : vector<2x128xf32>
    %190 = math.exp %189 : vector<2x128xf32>
    %cst_34 = arith.constant 1.000000e+00 : f32
    %191 = vector.broadcast %cst_34 : f32 to vector<2x128xf32>
    %192 = arith.addf %191, %190 : vector<2x128xf32>
    %193 = arith.divf %191, %192 : vector<2x128xf32>
    %194 = vector.extract_strided_slice %187 {offsets = [0, 128], sizes = [2, 128], strides = [1, 1]} : vector<2x512xf32> to vector<2x128xf32>
    %195 = arith.negf %194 : vector<2x128xf32>
    %196 = math.exp %195 : vector<2x128xf32>
    %cst_35 = arith.constant 1.000000e+00 : f32
    %197 = vector.broadcast %cst_35 : f32 to vector<2x128xf32>
    %198 = arith.addf %197, %196 : vector<2x128xf32>
    %199 = arith.divf %197, %198 : vector<2x128xf32>
    %200 = vector.extract_strided_slice %187 {offsets = [0, 256], sizes = [2, 128], strides = [1, 1]} : vector<2x512xf32> to vector<2x128xf32>
    %201 = math.tanh %200 : vector<2x128xf32>
    %202 = vector.extract_strided_slice %187 {offsets = [0, 384], sizes = [2, 128], strides = [1, 1]} : vector<2x512xf32> to vector<2x128xf32>
    %203 = arith.negf %202 : vector<2x128xf32>
    %204 = math.exp %203 : vector<2x128xf32>
    %cst_36 = arith.constant 1.000000e+00 : f32
    %205 = vector.broadcast %cst_36 : f32 to vector<2x128xf32>
    %206 = arith.addf %205, %204 : vector<2x128xf32>
    %207 = arith.divf %205, %206 : vector<2x128xf32>
    %208 = arith.mulf %199, %181 : vector<2x128xf32>
    %209 = arith.mulf %193, %201 : vector<2x128xf32>
    %210 = arith.addf %208, %209 : vector<2x128xf32>
    %211 = math.tanh %210 : vector<2x128xf32>
    %212 = arith.mulf %207, %211 : vector<2x128xf32>
    %213 = vector.extract_strided_slice %6 {offsets = [0, 7, 0], sizes = [2, 1, 512], strides = [1, 1, 1]} : vector<2x8x512xf32> to vector<2x1x512xf32>
    %214 = vector.shape_cast %213 : vector<2x1x512xf32> to vector<2x512xf32>
    %cst_37 = arith.constant dense<0.000000e+00> : vector<2x512xf32>
    %215 = tpu.matmul %212, %7, %cst_37 {dimension_numbers = #tpu.dot_dimension_numbers<[1], [0], [0], [1], [0, 0, 1, 1], [], []>} : vector<2x128xf32>, vector<128x512xf32>, vector<2x512xf32> -> vector<2x512xf32>
    %216 = arith.addf %214, %215 : vector<2x512xf32>
    %217 = vector.extract_strided_slice %216 {offsets = [0, 0], sizes = [2, 128], strides = [1, 1]} : vector<2x512xf32> to vector<2x128xf32>
    %218 = arith.negf %217 : vector<2x128xf32>
    %219 = math.exp %218 : vector<2x128xf32>
    %cst_38 = arith.constant 1.000000e+00 : f32
    %220 = vector.broadcast %cst_38 : f32 to vector<2x128xf32>
    %221 = arith.addf %220, %219 : vector<2x128xf32>
    %222 = arith.divf %220, %221 : vector<2x128xf32>
    %223 = vector.extract_strided_slice %216 {offsets = [0, 128], sizes = [2, 128], strides = [1, 1]} : vector<2x512xf32> to vector<2x128xf32>
    %224 = arith.negf %223 : vector<2x128xf32>
    %225 = math.exp %224 : vector<2x128xf32>
    %cst_39 = arith.constant 1.000000e+00 : f32
    %226 = vector.broadcast %cst_39 : f32 to vector<2x128xf32>
    %227 = arith.addf %226, %225 : vector<2x128xf32>
    %228 = arith.divf %226, %227 : vector<2x128xf32>
    %229 = vector.extract_strided_slice %216 {offsets = [0, 256], sizes = [2, 128], strides = [1, 1]} : vector<2x512xf32> to vector<2x128xf32>
    %230 = math.tanh %229 : vector<2x128xf32>
    %231 = vector.extract_strided_slice %216 {offsets = [0, 384], sizes = [2, 128], strides = [1, 1]} : vector<2x512xf32> to vector<2x128xf32>
    %232 = arith.negf %231 : vector<2x128xf32>
    %233 = math.exp %232 : vector<2x128xf32>
    %cst_40 = arith.constant 1.000000e+00 : f32
    %234 = vector.broadcast %cst_40 : f32 to vector<2x128xf32>
    %235 = arith.addf %234, %233 : vector<2x128xf32>
    %236 = arith.divf %234, %235 : vector<2x128xf32>
    %237 = arith.mulf %228, %210 : vector<2x128xf32>
    %238 = arith.mulf %222, %230 : vector<2x128xf32>
    %239 = arith.addf %237, %238 : vector<2x128xf32>
    %240 = math.tanh %239 : vector<2x128xf32>
    %241 = arith.mulf %236, %240 : vector<2x128xf32>
    %c0_41 = arith.constant 0 : index
    %c0_42 = arith.constant 0 : index
    %242 = vector.load %arg4[%c0_41, %c0_42] : memref<128x10xf32, #tpu.memory_space<vmem>>, vector<128x10xf32>
    %cst_43 = arith.constant dense<0.000000e+00> : vector<2x10xf32>
    %243 = tpu.matmul %241, %242, %cst_43 {dimension_numbers = #tpu.dot_dimension_numbers<[1], [0], [0], [1], [0, 0, 1, 1], [], []>} : vector<2x128xf32>, vector<128x10xf32>, vector<2x10xf32> -> vector<2x10xf32>
    %c0_44 = arith.constant 0 : index
    %c0_45 = arith.constant 0 : index
    %244 = vector.load %arg5[%c0_44, %c0_45] : memref<1x10xf32, #tpu.memory_space<vmem>>, vector<1x10xf32>
    %245 = vector.broadcast %244 : vector<1x10xf32> to vector<2x10xf32>
    %246 = arith.addf %243, %245 : vector<2x10xf32>
    %c0_46 = arith.constant 0 : index
    %c0_47 = arith.constant 0 : index
    %247 = vector.load %arg6[%c0_46, %c0_47] : memref<2x10xf32, #tpu.memory_space<vmem>>, vector<2x10xf32>
    tpu.vector_store %arg6[%c0_46, %c0_47], %246 {strides = array<i32>} : memref<2x10xf32, #tpu.memory_space<vmem>>, vector<2x10xf32>,
    return
  }
}

</mosaic_0001>

<llo_original>
// kernel: tpu_custom_call.1
$region0: #{tpu_custom_call.1}
  #allocation0 [shape = 'u32[]', space=smem, size = 0x4, offset = 0x4, fixed_abs, tag = 'smem constant byte address 0x4 - core index']
  #allocation1 [shape = 'u32[144,128]{1,0:T(1,128)}', space=vmem, size = 0x12000, scoped, tag = 'internal scratch']
  %s0 = inlined_call_operand.vmem [shape: f32[16,2], index: 0, kind: input, shape index: {}]
  %s1 = inlined_call_operand.vmem [shape: f32[2,512], index: 1, kind: input, shape index: {}]
  %s2 = inlined_call_operand.hbm [shape: f32[128,512], index: 2, kind: input, shape index: {}]
  %s3 = inlined_call_operand.vmem [shape: f32[1,512], index: 3, kind: input, shape index: {}]
  %s4 = inlined_call_operand.vmem [shape: f32[128,10], index: 4, kind: input, shape index: {}]
  %s5 = inlined_call_operand.vmem [shape: f32[1,10], index: 5, kind: input, shape index: {}]
  %s6 = inlined_call_operand.hbm [shape: f32[2,10], index: 6, kind: output, shape index: {}]
  %s7 = sld [smem:[#allocation0]]
  $region38: #{tpu_custom_call.1} parent=0
    _
  %s9 = ssub.s32 1, %s7
  %s10 = scalar_select 0, %s9, %s7
  $region1: #{tpu_custom_call.1} parent=0
    #allocation2 [shape = 'u8[262144]{0}', space=vmem, size = 0x40000, scoped, tag = 'input window, operand 2, single buffered']
    #allocation3 [shape = 's32[1]{0}', space=sflag, size = 0x4, scoped, tag = 'scoped memory for tpu_custom_call.1']
    #allocation4 [shape = 's32[1]{0}', space=sflag, size = 0x4, scoped, tag = 'scoped memory for tpu_custom_call.1']
    #allocation5 [shape = 'u8[1024]{0}', space=vmem, size = 0x400, scoped, tag = 'output window, operand 0, single buffered']
    %11 = vsyncpa [#allocation3], 0
    %12 = vsyncpa [#allocation4], 0
    // Predicated region
    $region2: #{tpu_custom_call.1} parent=1 // pred_check
      _
    $region3: #{tpu_custom_call.1} parent=1 // pred_check_branch
      %14 = sbr.rel (0) target = $region5
    $region4: #{tpu_custom_call.1} parent=1 // pred_region
      _
    $region5: #{tpu_custom_call.1} parent=1 // pred_fallthru
      _
    // Predicated region
    $region6: #{tpu_custom_call.1} parent=1 // pred_check
      _
    $region7: #{tpu_custom_call.1} parent=1 // pred_check_branch
      %16 = sbr.rel (0) target = $region9
    $region8: #{tpu_custom_call.1} parent=1 // pred_region
      _
    $region9: #{tpu_custom_call.1} parent=1 // pred_fallthru
      _
    // Predicated region
    $region10: #{tpu_custom_call.1} parent=1 // pred_check
      _
    $region11: #{tpu_custom_call.1} parent=1 // pred_check_branch
      %18 = sbr.rel (0) target = $region13
    $region12: #{tpu_custom_call.1} parent=1 // pred_region
      %s20 = ssub.s32 8192, 8192
      %21 = vsyncadd [#allocation3], %s20
      %s22 = sshll.u32 [#allocation2], 4
      %s23 = int_to_ptr.vmem [resolvable:$true] %s22
      %28 = dma.hbm_to_vmem [thread:$0]  %s2, 8192, %s23, [#allocation3], 512, 512, 32
    $region13: #{tpu_custom_call.1} parent=1 // pred_fallthru
      _
    // Predicated region
    $region14: #{tpu_custom_call.1} parent=1 // pred_check
      _
    $region15: #{tpu_custom_call.1} parent=1 // pred_check_branch
      %30 = sbr.rel (0) target = $region17
    $region16: #{tpu_custom_call.1} parent=1 // pred_region
      _
    $region17: #{tpu_custom_call.1} parent=1 // pred_fallthru
      _
    // Predicated region
    $region18: #{tpu_custom_call.1} parent=1 // pred_check
      _
    $region19: #{tpu_custom_call.1} parent=1 // pred_check_branch
      %32 = sbr.rel (0) target = $region21
    $region20: #{tpu_custom_call.1} parent=1 // pred_region
      _
    $region21: #{tpu_custom_call.1} parent=1 // pred_fallthru
      _
    // Predicated region
    $region22: #{tpu_custom_call.1} parent=1 // pred_check
      _
    $region23: #{tpu_custom_call.1} parent=1 // pred_check_branch
      %34 = sbr.rel (0) target = $region25
    $region24: #{tpu_custom_call.1} parent=1 // pred_region
      _
    $region25: #{tpu_custom_call.1} parent=1 // pred_fallthru
      _
    // Predicated region
    $region26: #{tpu_custom_call.1} parent=1 // pred_check
      _
    $region27: #{tpu_custom_call.1} parent=1 // pred_check_branch
      %36 = sbr.rel (0) target = $region29
    $region28: #{tpu_custom_call.1} parent=1 // pred_region
      %37 = dma.done [#allocation3], 8192
    $region29: #{tpu_custom_call.1} parent=1 // pred_fallthru
      _
    %v38 = vld [vmem:[%s0] sm:$0xff]
    %v39 = vld [vmem:[%s0 + $0x8] sm:$0xff]
    %v40 = vld [vmem:[%s1] sm:$0xff]
    %v41 = vld [vmem:[%s3] sm:$0xf]
    %v43 = vlaneseq
    %v44 = vshrl.u32 %v43, 7
    %v45 = vsub.s32 0, %v44
    %v46 = vrot.slane %v41, %v45
    %v47 = vlaneseq
    %v48 = vshrl.u32 %v47, 7
    %v49 = vsub.s32 1, %v48
    %v50 = vrot.slane %v41, %v49
    %v51 = vlaneseq
    %v52 = vshrl.u32 %v51, 7
    %v53 = vsub.s32 2, %v52
    %v54 = vrot.slane %v41, %v53
    %v55 = vlaneseq
    %v56 = vshrl.u32 %v55, 7
    %v57 = vsub.s32 3, %v56
    %v58 = vrot.slane %v41, %v57
    %v64 = vcombine.high %v40, %v40
    %v66 = vunpack.c.l.s4 1983009808
    %v67 = vunpack.c.0.s8 %v66
    %v68 = vlaneseq
    %v69 = vshrl.u32 %v68, 7
    %v70 = vsub.s32 %v67, %v69
    %v71 = vrot.slane %v40, %v70
    %v73 = vunpack.c.l.s4 1983009808
    %v74 = vunpack.c.0.s8 %v73
    %v75 = vlaneseq
    %v76 = vshrl.u32 %v75, 7
    %v77 = vsub.s32 %v74, %v76
    %v78 = vrot.slane %v64, %v77
    %v79 = vcombine.high %v71, %v71
    %v80 = vcombine.high %v78, %v78
    %vm81 = vcmask 15360
    %v83 = vsel %vm81, %v38, 0
    %v86 = vsel %vm81, %v39, 0
    %vm88 = vcmask 1041408
    %v89 = vsel %vm88, %v71, 0
    %v91 = vsel %vm88, %v79, 0
    %v93 = vsel %vm88, %v78, 0
    %v95 = vsel %vm88, %v80, 0
    %97 = vmatprep.subr.mxu0 %v91
    %98 = vmatpush1.msra.mxu0 %v89
    %99 = vmatprep.subr.mxu0 0.0
    %100 = vmatpush1.msra.mxu0 0.0
    %101 = vmatprep.subr.mxu0 0.0
    %102 = vmatpush1.msra.mxu0 0.0
    %103 = vmatprep.subr.mxu0 0.0
    %104 = vmatpush1.msra.mxu0 0.0
    %105 = vmatprep.subr.mxu0 0.0
    %106 = vmatpush1.msra.mxu0 0.0
    %107 = vmatprep.subr.mxu0 0.0
    %108 = vmatpush1.msra.mxu0 0.0
    %109 = vmatprep.subr.mxu0 0.0
    %110 = vmatpush1.msra.mxu0 0.0
    %111 = vmatprep.subr.mxu0 0.0
    %112 = vmatpush1.msra.mxu0 0.0
    %113 = vmatprep.subr.mxu0 0.0
    %114 = vmatpush1.msra.mxu0 0.0
    %115 = vmatprep.subr.mxu0 0.0
    %116 = vmatpush1.msra.mxu0 0.0
    %117 = vmatprep.subr.mxu0 0.0
    %118 = vmatpush1.msra.mxu0 0.0
    %119 = vmatprep.subr.mxu0 0.0
    %120 = vmatpush1.msra.mxu0 0.0
    %121 = vmatprep.subr.mxu0 0.0
    %122 = vmatpush1.msra.mxu0 0.0
    %123 = vmatprep.subr.mxu0 0.0
    %124 = vmatpush1.msra.mxu0 0.0
    %125 = vmatprep.subr.mxu0 0.0
    %126 = vmatpush1.msra.mxu0 0.0
    %127 = vmatprep.subr.mxu0 0.0
    %128 = vmatpush1.msra.mxu0 0.0
    %129 = vmatprep.subr.mxu0 0.0
    %130 = vmatpush1.msra.mxu0 0.0
    %131 = vmatprep.subr.mxu0 0.0
    %132 = vmatpush1.msra.mxu0 0.0
    %133 = vmatprep.subr.mxu0 0.0
    %134 = vmatpush1.msra.mxu0 0.0
    %135 = vmatprep.subr.mxu0 0.0
    %136 = vmatpush1.msra.mxu0 0.0
    %137 = vmatprep.subr.mxu0 0.0
    %138 = vmatpush1.msra.mxu0 0.0
    %139 = vmatprep.subr.mxu0 0.0
    %140 = vmatpush1.msra.mxu0 0.0
    %141 = vmatprep.subr.mxu0 0.0
    %142 = vmatpush1.msra.mxu0 0.0
    %143 = vmatprep.subr.mxu0 0.0
    %144 = vmatpush1.msra.mxu0 0.0
    %145 = vmatprep.subr.mxu0 0.0
    %146 = vmatpush1.msra.mxu0 0.0
    %147 = vmatprep.subr.mxu0 0.0
    %148 = vmatpush1.msra.mxu0 0.0
    %149 = vmatprep.subr.mxu0 0.0
    %150 = vmatpush1.msra.mxu0 0.0
    %151 = vmatprep.subr.mxu0 0.0
    %152 = vmatpush1.msra.mxu0 0.0
    %153 = vmatprep.subr.mxu0 0.0
    %154 = vmatpush1.msra.mxu0 0.0
    %155 = vmatprep.subr.mxu0 0.0
    %156 = vmatpush1.msra.mxu0 0.0
    %157 = vmatprep.subr.mxu0 0.0
    %158 = vmatpush1.msra.mxu0 0.0
    %159 = vmatprep.subr.mxu0 0.0
    %160 = vmatpush1.msra.mxu0 0.0
    %161 = vmatprep.mubr.f32.mxu0 0.0
    %162 = vmatmul.mubr.f32.gmra.mrb[0].mxu0 %v83
    %v163 = vpop.f32.mrb[0].mxu0
    %v164 = vadd.f32 %v46, %v163
    %v165 = vpop.f32.mrb[0].mxu0
    %v166 = vadd.f32 %v50, %v165
    %167 = vmatprep.mubr.f32.mxu0 0.0
    %168 = vmatmul.mubr.f32.gmra.mrb[0].mxu0 %v86
    %v169 = vpop.f32.mrb[0].mxu0
    %v170 = vadd.f32 %v46, %v169
    %v171 = vpop.f32.mrb[0].mxu0
    %v172 = vadd.f32 %v50, %v171
    %173 = vdwg.mxu0
    %174 = vmatprep.subr.mxu0 %v95
    %175 = vmatpush1.msra.mxu0 %v93
    %176 = vmatprep.subr.mxu0 0.0
    %177 = vmatpush1.msra.mxu0 0.0
    %178 = vmatprep.subr.mxu0 0.0
    %179 = vmatpush1.msra.mxu0 0.0
    %180 = vmatprep.subr.mxu0 0.0
    %181 = vmatpush1.msra.mxu0 0.0
    %182 = vmatprep.subr.mxu0 0.0
    %183 = vmatpush1.msra.mxu0 0.0
    %184 = vmatprep.subr.mxu0 0.0
    %185 = vmatpush1.msra.mxu0 0.0
    %186 = vmatprep.subr.mxu0 0.0
    %187 = vmatpush1.msra.mxu0 0.0
    %188 = vmatprep.subr.mxu0 0.0
    %189 = vmatpush1.msra.mxu0 0.0
    %190 = vmatprep.subr.mxu0 0.0
    %191 = vmatpush1.msra.mxu0 0.0
    %192 = vmatprep.subr.mxu0 0.0
    %193 = vmatpush1.msra.mxu0 0.0
    %194 = vmatprep.subr.mxu0 0.0
    %195 = vmatpush1.msra.mxu0 0.0
    %196 = vmatprep.subr.mxu0 0.0
    %197 = vmatpush1.msra.mxu0 0.0
    %198 = vmatprep.subr.mxu0 0.0
    %199 = vmatpush1.msra.mxu0 0.0
    %200 = vmatprep.subr.mxu0 0.0
    %201 = vmatpush1.msra.mxu0 0.0
    %202 = vmatprep.subr.mxu0 0.0
    %203 = vmatpush1.msra.mxu0 0.0
    %204 = vmatprep.subr.mxu0 0.0
    %205 = vmatpush1.msra.mxu0 0.0
    %206 = vmatprep.subr.mxu0 0.0
    %207 = vmatpush1.msra.mxu0 0.0
    %208 = vmatprep.subr.mxu0 0.0
    %209 = vmatpush1.msra.mxu0 0.0
    %210 = vmatprep.subr.mxu0 0.0
    %211 = vmatpush1.msra.mxu0 0.0
    %212 = vmatprep.subr.mxu0 0.0
    %213 = vmatpush1.msra.mxu0 0.0
    %214 = vmatprep.subr.mxu0 0.0
    %215 = vmatpush1.msra.mxu0 0.0
    %216 = vmatprep.subr.mxu0 0.0
    %217 = vmatpush1.msra.mxu0 0.0
    %218 = vmatprep.subr.mxu0 0.0
    %219 = vmatpush1.msra.mxu0 0.0
    %220 = vmatprep.subr.mxu0 0.0
    %221 = vmatpush1.msra.mxu0 0.0
    %222 = vmatprep.subr.mxu0 0.0
    %223 = vmatpush1.msra.mxu0 0.0
    %224 = vmatprep.subr.mxu0 0.0
    %225 = vmatpush1.msra.mxu0 0.0
    %226 = vmatprep.subr.mxu0 0.0
    %227 = vmatpush1.msra.mxu0 0.0
    %228 = vmatprep.subr.mxu0 0.0
    %229 = vmatpush1.msra.mxu0 0.0
    %230 = vmatprep.subr.mxu0 0.0
    %231 = vmatpush1.msra.mxu0 0.0
    %232 = vmatprep.subr.mxu0 0.0
    %233 = vmatpush1.msra.mxu0 0.0
    %234 = vmatprep.subr.mxu0 0.0
    %235 = vmatpush1.msra.mxu0 0.0
    %236 = vmatprep.subr.mxu0 0.0
    %237 = vmatpush1.msra.mxu0 0.0
    %238 = vmatprep.mubr.f32.mxu0 0.0
    %239 = vmatmul.mubr.f32.gmra.mrb[0].mxu0 %v83
    %v240 = vpop.f32.mrb[0].mxu0
    %v241 = vadd.f32 %v54, %v240
    %v242 = vpop.f32.mrb[0].mxu0
    %v243 = vadd.f32 %v58, %v242
    %244 = vmatprep.mubr.f32.mxu0 0.0
    %245 = vmatmul.mubr.f32.gmra.mrb[0].mxu0 %v86
    %v246 = vpop.f32.mrb[0].mxu0
    %v247 = vadd.f32 %v54, %v246
    %v248 = vpop.f32.mrb[0].mxu0
    %v249 = vadd.f32 %v58, %v248
    %250 = vdwg.mxu0
    %v251 = vld [vmem:[#allocation2] sm:$0xff]
    %v252 = vld [vmem:[#allocation2 + $0x8] sm:$0xff]
    %v253 = vld [vmem:[#allocation2 + $0x10] sm:$0xff]
    %v254 = vld [vmem:[#allocation2 + $0x18] sm:$0xff]
    %v255 = vld [vmem:[#allocation2 + $0x20] sm:$0xff]
    %v256 = vld [vmem:[#allocation2 + $0x28] sm:$0xff]
    %v257 = vld [vmem:[#allocation2 + $0x30] sm:$0xff]
    %v258 = vld [vmem:[#allocation2 + $0x38] sm:$0xff]
    %v259 = vld [vmem:[#allocation2 + $0x40] sm:$0xff]
    %v260 = vld [vmem:[#allocation2 + $0x48] sm:$0xff]
    %v261 = vld [vmem:[#allocation2 + $0x50] sm:$0xff]
    %v262 = vld [vmem:[#allocation2 + $0x58] sm:$0xff]
    %v263 = vld [vmem:[#allocation2 + $0x60] sm:$0xff]
    %v264 = vld [vmem:[#allocation2 + $0x68] sm:$0xff]
    %v265 = vld [vmem:[#allocation2 + $0x70] sm:$0xff]
    %v266 = vld [vmem:[#allocation2 + $0x78] sm:$0xff]
    %v267 = vld [vmem:[#allocation2 + $0x80] sm:$0xff]
    %v268 = vld [vmem:[#allocation2 + $0x88] sm:$0xff]
    %v269 = vld [vmem:[#allocation2 + $0x90] sm:$0xff]
    %v270 = vld [vmem:[#allocation2 + $0x98] sm:$0xff]
    %v271 = vld [vmem:[#allocation2 + $0xa0] sm:$0xff]
    %v272 = vld [vmem:[#allocation2 + $0xa8] sm:$0xff]
    %v273 = vld [vmem:[#allocation2 + $0xb0] sm:$0xff]
    %v274 = vld [vmem:[#allocation2 + $0xb8] sm:$0xff]
    %v275 = vld [vmem:[#allocation2 + $0xc0] sm:$0xff]
    %v276 = vld [vmem:[#allocation2 + $0xc8] sm:$0xff]
    %v277 = vld [vmem:[#allocation2 + $0xd0] sm:$0xff]
    %v278 = vld [vmem:[#allocation2 + $0xd8] sm:$0xff]
    %v279 = vld [vmem:[#allocation2 + $0xe0] sm:$0xff]
    %v280 = vld [vmem:[#allocation2 + $0xe8] sm:$0xff]
    %v281 = vld [vmem:[#allocation2 + $0xf0] sm:$0xff]
    %v282 = vld [vmem:[#allocation2 + $0xf8] sm:$0xff]
    %v283 = vld [vmem:[#allocation2 + $0x100] sm:$0xff]
    %v284 = vld [vmem:[#allocation2 + $0x108] sm:$0xff]
    %v285 = vld [vmem:[#allocation2 + $0x110] sm:$0xff]
    %v286 = vld [vmem:[#allocation2 + $0x118] sm:$0xff]
    %v287 = vld [vmem:[#allocation2 + $0x120] sm:$0xff]
    %v288 = vld [vmem:[#allocation2 + $0x128] sm:$0xff]
    %v289 = vld [vmem:[#allocation2 + $0x130] sm:$0xff]
    %v290 = vld [vmem:[#allocation2 + $0x138] sm:$0xff]
    %v291 = vld [vmem:[#allocation2 + $0x140] sm:$0xff]
    %v292 = vld [vmem:[#allocation2 + $0x148] sm:$0xff]
    %v293 = vld [vmem:[#allocation2 + $0x150] sm:$0xff]
    %v294 = vld [vmem:[#allocation2 + $0x158] sm:$0xff]
    %v295 = vld [vmem:[#allocation2 + $0x160] sm:$0xff]
    %v296 = vld [vmem:[#allocation2 + $0x168] sm:$0xff]
    %v297 = vld [vmem:[#allocation2 + $0x170] sm:$0xff]
    %v298 = vld [vmem:[#allocation2 + $0x178] sm:$0xff]
    %v299 = vld [vmem:[#allocation2 + $0x180] sm:$0xff]
    %v300 = vld [vmem:[#allocation2 + $0x188] sm:$0xff]
    %v301 = vld [vmem:[#allocation2 + $0x190] sm:$0xff]
    %v302 = vld [vmem:[#allocation2 + $0x198] sm:$0xff]
    %v303 = vld [vmem:[#allocation2 + $0x1a0] sm:$0xff]
    %v304 = vld [vmem:[#allocation2 + $0x1a8] sm:$0xff]
    %v305 = vld [vmem:[#allocation2 + $0x1b0] sm:$0xff]
    %v306 = vld [vmem:[#allocation2 + $0x1b8] sm:$0xff]
    %v307 = vld [vmem:[#allocation2 + $0x1c0] sm:$0xff]
    %v308 = vld [vmem:[#allocation2 + $0x1c8] sm:$0xff]
    %v309 = vld [vmem:[#allocation2 + $0x1d0] sm:$0xff]
    %v310 = vld [vmem:[#allocation2 + $0x1d8] sm:$0xff]
    %v311 = vld [vmem:[#allocation2 + $0x1e0] sm:$0xff]
    %v312 = vld [vmem:[#allocation2 + $0x1e8] sm:$0xff]
    %v313 = vld [vmem:[#allocation2 + $0x1f0] sm:$0xff]
    %v314 = vld [vmem:[#allocation2 + $0x1f8] sm:$0xff]
    %315 = vmatprep.subr.mxu0 %v252
    %316 = vmatpush1.msra.mxu0 %v251
    %317 = vmatprep.subr.mxu0 %v256
    %318 = vmatpush1.msra.mxu0 %v255
    %319 = vmatprep.subr.mxu0 %v260
    %320 = vmatpush1.msra.mxu0 %v259
    %321 = vmatprep.subr.mxu0 %v264
    %322 = vmatpush1.msra.mxu0 %v263
    %323 = vmatprep.subr.mxu0 %v268
    %324 = vmatpush1.msra.mxu0 %v267
    %325 = vmatprep.subr.mxu0 %v272
    %326 = vmatpush1.msra.mxu0 %v271
    %327 = vmatprep.subr.mxu0 %v276
    %328 = vmatpush1.msra.mxu0 %v275
    %329 = vmatprep.subr.mxu0 %v280
    %330 = vmatpush1.msra.mxu0 %v279
    %331 = vmatprep.subr.mxu0 %v284
    %332 = vmatpush1.msra.mxu0 %v283
    %333 = vmatprep.subr.mxu0 %v288
    %334 = vmatpush1.msra.mxu0 %v287
    %335 = vmatprep.subr.mxu0 %v292
    %336 = vmatpush1.msra.mxu0 %v291
    %337 = vmatprep.subr.mxu0 %v296
    %338 = vmatpush1.msra.mxu0 %v295
    %339 = vmatprep.subr.mxu0 %v300
    %340 = vmatpush1.msra.mxu0 %v299
    %341 = vmatprep.subr.mxu0 %v304
    %342 = vmatpush1.msra.mxu0 %v303
    %343 = vmatprep.subr.mxu0 %v308
    %344 = vmatpush1.msra.mxu0 %v307
    %345 = vmatprep.subr.mxu0 %v312
    %346 = vmatpush1.msra.mxu0 %v311
    %347 = vmatprep.subr.mxu0 0.0
    %348 = vmatpush1.msra.mxu0 0.0
    %349 = vmatprep.subr.mxu0 0.0
    %350 = vmatpush1.msra.mxu0 0.0
    %351 = vmatprep.subr.mxu0 0.0
    %352 = vmatpush1.msra.mxu0 0.0
    %353 = vmatprep.subr.mxu0 0.0
    %354 = vmatpush1.msra.mxu0 0.0
    %355 = vmatprep.subr.mxu0 0.0
    %356 = vmatpush1.msra.mxu0 0.0
    %357 = vmatprep.subr.mxu0 0.0
    %358 = vmatpush1.msra.mxu0 0.0
    %359 = vmatprep.subr.mxu0 0.0
    %360 = vmatpush1.msra.mxu0 0.0
    %361 = vmatprep.subr.mxu0 0.0
    %362 = vmatpush1.msra.mxu0 0.0
    %363 = vmatprep.subr.mxu0 0.0
    %364 = vmatpush1.msra.mxu0 0.0
    %365 = vmatprep.subr.mxu0 0.0
    %366 = vmatpush1.msra.mxu0 0.0
    %367 = vmatprep.subr.mxu0 0.0
    %368 = vmatpush1.msra.mxu0 0.0
    %369 = vmatprep.subr.mxu0 0.0
    %370 = vmatpush1.msra.mxu0 0.0
    %371 = vmatprep.subr.mxu0 0.0
    %372 = vmatpush1.msra.mxu0 0.0
    %373 = vmatprep.subr.mxu0 0.0
    %374 = vmatpush1.msra.mxu0 0.0
    %375 = vmatprep.subr.mxu0 0.0
    %376 = vmatpush1.msra.mxu0 0.0
    %377 = vmatprep.subr.mxu0 0.0
    %378 = vmatpush1.msra.mxu0 0.0
    %379 = vmatprep.mubr.f32.mxu0 0.0
    %380 = vmatmul.mubr.f32.gmra.mrb[0].mxu0 0.0
    %v381 = vpop.f32.mrb[0].mxu0
    %v382 = vadd.f32 0.0, %v381
    %v383 = vpop.f32.mrb[0].mxu0
    %v384 = vadd.f32 0.0, %v383
    %385 = vdwg.mxu0
    %386 = vmatprep.subr.mxu0 %v254
    %387 = vmatpush1.msra.mxu0 %v253
    %388 = vmatprep.subr.mxu0 %v258
    %389 = vmatpush1.msra.mxu0 %v257
    %390 = vmatprep.subr.mxu0 %v262
    %391 = vmatpush1.msra.mxu0 %v261
    %392 = vmatprep.subr.mxu0 %v266
    %393 = vmatpush1.msra.mxu0 %v265
    %394 = vmatprep.subr.mxu0 %v270
    %395 = vmatpush1.msra.mxu0 %v269
    %396 = vmatprep.subr.mxu0 %v274
    %397 = vmatpush1.msra.mxu0 %v273
    %398 = vmatprep.subr.mxu0 %v278
    %399 = vmatpush1.msra.mxu0 %v277
    %400 = vmatprep.subr.mxu0 %v282
    %401 = vmatpush1.msra.mxu0 %v281
    %402 = vmatprep.subr.mxu0 %v286
    %403 = vmatpush1.msra.mxu0 %v285
    %404 = vmatprep.subr.mxu0 %v290
    %405 = vmatpush1.msra.mxu0 %v289
    %406 = vmatprep.subr.mxu0 %v294
    %407 = vmatpush1.msra.mxu0 %v293
    %408 = vmatprep.subr.mxu0 %v298
    %409 = vmatpush1.msra.mxu0 %v297
    %410 = vmatprep.subr.mxu0 %v302
    %411 = vmatpush1.msra.mxu0 %v301
    %412 = vmatprep.subr.mxu0 %v306
    %413 = vmatpush1.msra.mxu0 %v305
    %414 = vmatprep.subr.mxu0 %v310
    %415 = vmatpush1.msra.mxu0 %v309
    %416 = vmatprep.subr.mxu0 %v314
    %417 = vmatpush1.msra.mxu0 %v313
    %418 = vmatprep.subr.mxu0 0.0
    %419 = vmatpush1.msra.mxu0 0.0
    %420 = vmatprep.subr.mxu0 0.0
    %421 = vmatpush1.msra.mxu0 0.0
    %422 = vmatprep.subr.mxu0 0.0
    %423 = vmatpush1.msra.mxu0 0.0
    %424 = vmatprep.subr.mxu0 0.0
    %425 = vmatpush1.msra.mxu0 0.0
    %426 = vmatprep.subr.mxu0 0.0
    %427 = vmatpush1.msra.mxu0 0.0
    %428 = vmatprep.subr.mxu0 0.0
    %429 = vmatpush1.msra.mxu0 0.0
    %430 = vmatprep.subr.mxu0 0.0
    %431 = vmatpush1.msra.mxu0 0.0
    %432 = vmatprep.subr.mxu0 0.0
    %433 = vmatpush1.msra.mxu0 0.0
    %434 = vmatprep.subr.mxu0 0.0
    %435 = vmatpush1.msra.mxu0 0.0
    %436 = vmatprep.subr.mxu0 0.0
    %437 = vmatpush1.msra.mxu0 0.0
    %438 = vmatprep.subr.mxu0 0.0
    %439 = vmatpush1.msra.mxu0 0.0
    %440 = vmatprep.subr.mxu0 0.0
    %441 = vmatpush1.msra.mxu0 0.0
    %442 = vmatprep.subr.mxu0 0.0
    %443 = vmatpush1.msra.mxu0 0.0
    %444 = vmatprep.subr.mxu0 0.0
    %445 = vmatpush1.msra.mxu0 0.0
    %446 = vmatprep.subr.mxu0 0.0
    %447 = vmatpush1.msra.mxu0 0.0
    %448 = vmatprep.subr.mxu0 0.0
    %449 = vmatpush1.msra.mxu0 0.0
    %450 = vmatprep.mubr.f32.mxu0 0.0
    %451 = vmatmul.mubr.f32.gmra.mrb[0].mxu0 0.0
    %v452 = vpop.f32.mrb[0].mxu0
    %v453 = vadd.f32 0.0, %v452
    %v454 = vpop.f32.mrb[0].mxu0
    %v455 = vadd.f32 0.0, %v454
    %456 = vdwg.mxu0
    %v461 = vrot.slane %v382, 1
    %v462 = vrot.slane %v384, 1
    %v463 = vrot.slane %v453, 1
    %v464 = vrot.slane %v455, 1
    %v473 = vadd.f32 %v164, %v382
    %v474 = vadd.f32 %v166, %v384
    %v475 = vadd.f32 %v241, %v453
    %v476 = vadd.f32 %v243, %v455
    %v477 = vadd.f32 %v170, %v461
    %v478 = vadd.f32 %v172, %v462
    %v479 = vadd.f32 %v247, %v463
    %v480 = vadd.f32 %v249, %v464
    %v481 = vxor.u32 %v473, 2147483648
    %v482 = vxor.u32 %v477, 2147483648
    %v483 = vmul.f32 %v481, 1.442695
    %v484 = vpow.pop %v483
    %v485 = vmul.f32 %v482, 1.442695
    %v486 = vpow.pop %v485
    %v487 = vadd.f32 %v484, 1.0
    %v488 = vadd.f32 %v486, 1.0
    %v489 = vrcp.pop %v487
    %v490 = vmul.f32 1.0, %v489
    %v491 = vrcp.pop %v488
    %v492 = vmul.f32 1.0, %v491
    %v493 = vxor.u32 %v474, 2147483648
    %v494 = vxor.u32 %v478, 2147483648
    %v495 = vmul.f32 %v493, 1.442695
    %v496 = vpow.pop %v495
    %v497 = vmul.f32 %v494, 1.442695
    %v498 = vpow.pop %v497
    %v499 = vadd.f32 %v496, 1.0
    %v500 = vadd.f32 %v498, 1.0
    %v501 = vrcp.pop %v499
    %v502 = vmul.f32 1.0, %v501
    %v503 = vrcp.pop %v500
    %v504 = vmul.f32 1.0, %v503
    %v505 = vtanh.pop %v475
    %v506 = vtanh.pop %v479
    %v507 = vxor.u32 %v476, 2147483648
    %v508 = vxor.u32 %v480, 2147483648
    %v509 = vmul.f32 %v507, 1.442695
    %v510 = vpow.pop %v509
    %v511 = vmul.f32 %v508, 1.442695
    %v512 = vpow.pop %v511
    %v513 = vadd.f32 %v510, 1.0
    %v514 = vadd.f32 %v512, 1.0
    %v515 = vrcp.pop %v513
    %v516 = vmul.f32 1.0, %v515
    %v517 = vrcp.pop %v514
    %v518 = vmul.f32 1.0, %v517
    %v519 = vmul.f32 %v502, 0.0
    %v520 = vmul.f32 %v504, 0.0
    %v521 = vmul.f32 %v490, %v505
    %v522 = vmul.f32 %v492, %v506
    %v523 = vadd.f32 %v519, %v521
    %v524 = vadd.f32 %v520, %v522
    %v525 = vtanh.pop %v523
    %v526 = vtanh.pop %v524
    %v527 = vmul.f32 %v516, %v525
    %v528 = vmul.f32 %v518, %v526
    %v531 = vrot.slane %v528, 7
    %vm532 = vcmask 1041409
    %v533 = vsel %vm532, %v531, %v527
    %535 = vmatprep.subr.mxu0 %v252
    %536 = vmatpush1.msra.mxu0 %v251
    %537 = vmatprep.subr.mxu0 %v256
    %538 = vmatpush1.msra.mxu0 %v255
    %539 = vmatprep.subr.mxu0 %v260
    %540 = vmatpush1.msra.mxu0 %v259
    %541 = vmatprep.subr.mxu0 %v264
    %542 = vmatpush1.msra.mxu0 %v263
    %543 = vmatprep.subr.mxu0 %v268
    %544 = vmatpush1.msra.mxu0 %v267
    %545 = vmatprep.subr.mxu0 %v272
    %546 = vmatpush1.msra.mxu0 %v271
    %547 = vmatprep.subr.mxu0 %v276
    %548 = vmatpush1.msra.mxu0 %v275
    %549 = vmatprep.subr.mxu0 %v280
    %550 = vmatpush1.msra.mxu0 %v279
    %551 = vmatprep.subr.mxu0 %v284
    %552 = vmatpush1.msra.mxu0 %v283
    %553 = vmatprep.subr.mxu0 %v288
    %554 = vmatpush1.msra.mxu0 %v287
    %555 = vmatprep.subr.mxu0 %v292
    %556 = vmatpush1.msra.mxu0 %v291
    %557 = vmatprep.subr.mxu0 %v296
    %558 = vmatpush1.msra.mxu0 %v295
    %559 = vmatprep.subr.mxu0 %v300
    %560 = vmatpush1.msra.mxu0 %v299
    %561 = vmatprep.subr.mxu0 %v304
    %562 = vmatpush1.msra.mxu0 %v303
    %563 = vmatprep.subr.mxu0 %v308
    %564 = vmatpush1.msra.mxu0 %v307
    %565 = vmatprep.subr.mxu0 %v312
    %566 = vmatpush1.msra.mxu0 %v311
    %567 = vmatprep.subr.mxu0 0.0
    %568 = vmatpush1.msra.mxu0 0.0
    %569 = vmatprep.subr.mxu0 0.0
    %570 = vmatpush1.msra.mxu0 0.0
    %571 = vmatprep.subr.mxu0 0.0
    %572 = vmatpush1.msra.mxu0 0.0
    %573 = vmatprep.subr.mxu0 0.0
    %574 = vmatpush1.msra.mxu0 0.0
    %575 = vmatprep.subr.mxu0 0.0
    %576 = vmatpush1.msra.mxu0 0.0
    %577 = vmatprep.subr.mxu0 0.0
    %578 = vmatpush1.msra.mxu0 0.0
    %579 = vmatprep.subr.mxu0 0.0
    %580 = vmatpush1.msra.mxu0 0.0
    %581 = vmatprep.subr.mxu0 0.0
    %582 = vmatpush1.msra.mxu0 0.0
    %583 = vmatprep.subr.mxu0 0.0
    %584 = vmatpush1.msra.mxu0 0.0
    %585 = vmatprep.subr.mxu0 0.0
    %586 = vmatpush1.msra.mxu0 0.0
    %587 = vmatprep.subr.mxu0 0.0
    %588 = vmatpush1.msra.mxu0 0.0
    %589 = vmatprep.subr.mxu0 0.0
    %590 = vmatpush1.msra.mxu0 0.0
    %591 = vmatprep.subr.mxu0 0.0
    %592 = vmatpush1.msra.mxu0 0.0
    %593 = vmatprep.subr.mxu0 0.0
    %594 = vmatpush1.msra.mxu0 0.0
    %595 = vmatprep.subr.mxu0 0.0
    %596 = vmatpush1.msra.mxu0 0.0
    %597 = vmatprep.subr.mxu0 0.0
    %598 = vmatpush1.msra.mxu0 0.0
    %599 = vmatprep.mubr.f32.mxu0 0.0
    %600 = vmatmul.mubr.f32.gmra.mrb[0].mxu0 %v533
    %v601 = vpop.f32.mrb[0].mxu0
    %v602 = vadd.f32 0.0, %v601
    %v603 = vpop.f32.mrb[0].mxu0
    %v604 = vadd.f32 0.0, %v603
    %605 = vdwg.mxu0
    %606 = vmatprep.subr.mxu0 %v254
    %607 = vmatpush1.msra.mxu0 %v253
    %608 = vmatprep.subr.mxu0 %v258
    %609 = vmatpush1.msra.mxu0 %v257
    %610 = vmatprep.subr.mxu0 %v262
    %611 = vmatpush1.msra.mxu0 %v261
    %612 = vmatprep.subr.mxu0 %v266
    %613 = vmatpush1.msra.mxu0 %v265
    %614 = vmatprep.subr.mxu0 %v270
    %615 = vmatpush1.msra.mxu0 %v269
    %616 = vmatprep.subr.mxu0 %v274
    %617 = vmatpush1.msra.mxu0 %v273
    %618 = vmatprep.subr.mxu0 %v278
    %619 = vmatpush1.msra.mxu0 %v277
    %620 = vmatprep.subr.mxu0 %v282
    %621 = vmatpush1.msra.mxu0 %v281
    %622 = vmatprep.subr.mxu0 %v286
    %623 = vmatpush1.msra.mxu0 %v285
    %624 = vmatprep.subr.mxu0 %v290
    %625 = vmatpush1.msra.mxu0 %v289
    %626 = vmatprep.subr.mxu0 %v294
    %627 = vmatpush1.msra.mxu0 %v293
    %628 = vmatprep.subr.mxu0 %v298
    %629 = vmatpush1.msra.mxu0 %v297
    %630 = vmatprep.subr.mxu0 %v302
    %631 = vmatpush1.msra.mxu0 %v301
    %632 = vmatprep.subr.mxu0 %v306
    %633 = vmatpush1.msra.mxu0 %v305
    %634 = vmatprep.subr.mxu0 %v310
    %635 = vmatpush1.msra.mxu0 %v309
    %636 = vmatprep.subr.mxu0 %v314
    %637 = vmatpush1.msra.mxu0 %v313
    %638 = vmatprep.subr.mxu0 0.0
    %639 = vmatpush1.msra.mxu0 0.0
    %640 = vmatprep.subr.mxu0 0.0
    %641 = vmatpush1.msra.mxu0 0.0
    %642 = vmatprep.subr.mxu0 0.0
    %643 = vmatpush1.msra.mxu0 0.0
    %644 = vmatprep.subr.mxu0 0.0
    %645 = vmatpush1.msra.mxu0 0.0
    %646 = vmatprep.subr.mxu0 0.0
    %647 = vmatpush1.msra.mxu0 0.0
    %648 = vmatprep.subr.mxu0 0.0
    %649 = vmatpush1.msra.mxu0 0.0
    %650 = vmatprep.subr.mxu0 0.0
    %651 = vmatpush1.msra.mxu0 0.0
    %652 = vmatprep.subr.mxu0 0.0
    %653 = vmatpush1.msra.mxu0 0.0
    %654 = vmatprep.subr.mxu0 0.0
    %655 = vmatpush1.msra.mxu0 0.0
    %656 = vmatprep.subr.mxu0 0.0
    %657 = vmatpush1.msra.mxu0 0.0
    %658 = vmatprep.subr.mxu0 0.0
    %659 = vmatpush1.msra.mxu0 0.0
    %660 = vmatprep.subr.mxu0 0.0
    %661 = vmatpush1.msra.mxu0 0.0
    %662 = vmatprep.subr.mxu0 0.0
    %663 = vmatpush1.msra.mxu0 0.0
    %664 = vmatprep.subr.mxu0 0.0
    %665 = vmatpush1.msra.mxu0 0.0
    %666 = vmatprep.subr.mxu0 0.0
    %667 = vmatpush1.msra.mxu0 0.0
    %668 = vmatprep.subr.mxu0 0.0
    %669 = vmatpush1.msra.mxu0 0.0
    %670 = vmatprep.mubr.f32.mxu0 0.0
    %671 = vmatmul.mubr.f32.gmra.mrb[0].mxu0 %v533
    %v672 = vpop.f32.mrb[0].mxu0
    %v673 = vadd.f32 0.0, %v672
    %v674 = vpop.f32.mrb[0].mxu0
    %v675 = vadd.f32 0.0, %v674
    %676 = vdwg.mxu0
    %v681 = vrot.slane %v602, 7
    %v682 = vrot.slane %v604, 7
    %v683 = vrot.slane %v673, 7
    %v684 = vrot.slane %v675, 7
    %v693 = vadd.f32 %v164, %v681
    %v694 = vadd.f32 %v166, %v682
    %v695 = vadd.f32 %v241, %v683
    %v696 = vadd.f32 %v243, %v684
    %v697 = vadd.f32 %v170, %v602
    %v698 = vadd.f32 %v172, %v604
    %v699 = vadd.f32 %v247, %v673
    %v700 = vadd.f32 %v249, %v675
    %v701 = vxor.u32 %v693, 2147483648
    %v702 = vxor.u32 %v697, 2147483648
    %v703 = vmul.f32 %v701, 1.442695
    %v704 = vpow.pop %v703
    %v705 = vmul.f32 %v702, 1.442695
    %v706 = vpow.pop %v705
    %v707 = vadd.f32 %v704, 1.0
    %v708 = vadd.f32 %v706, 1.0
    %v709 = vrcp.pop %v707
    %v710 = vmul.f32 1.0, %v709
    %v711 = vrcp.pop %v708
    %v712 = vmul.f32 1.0, %v711
    %v713 = vxor.u32 %v694, 2147483648
    %v714 = vxor.u32 %v698, 2147483648
    %v715 = vmul.f32 %v713, 1.442695
    %v716 = vpow.pop %v715
    %v717 = vmul.f32 %v714, 1.442695
    %v718 = vpow.pop %v717
    %v719 = vadd.f32 %v716, 1.0
    %v720 = vadd.f32 %v718, 1.0
    %v721 = vrcp.pop %v719
    %v722 = vmul.f32 1.0, %v721
    %v723 = vrcp.pop %v720
    %v724 = vmul.f32 1.0, %v723
    %v725 = vtanh.pop %v695
    %v726 = vtanh.pop %v699
    %v727 = vxor.u32 %v696, 2147483648
    %v728 = vxor.u32 %v700, 2147483648
    %v729 = vmul.f32 %v727, 1.442695
    %v730 = vpow.pop %v729
    %v731 = vmul.f32 %v728, 1.442695
    %v732 = vpow.pop %v731
    %v733 = vadd.f32 %v730, 1.0
    %v734 = vadd.f32 %v732, 1.0
    %v735 = vrcp.pop %v733
    %v736 = vmul.f32 1.0, %v735
    %v737 = vrcp.pop %v734
    %v738 = vmul.f32 1.0, %v737
    %v741 = vrot.slane %v523, 7
    %v742 = vrot.slane %v524, 7
    %v745 = vmul.f32 %v722, %v741
    %v746 = vmul.f32 %v724, %v742
    %v747 = vmul.f32 %v710, %v725
    %v748 = vmul.f32 %v712, %v726
    %v749 = vadd.f32 %v745, %v747
    %v750 = vadd.f32 %v746, %v748
    %v751 = vtanh.pop %v749
    %v752 = vtanh.pop %v750
    %v753 = vmul.f32 %v736, %v751
    %v754 = vmul.f32 %v738, %v752
    %v757 = vrot.slane %v753, 1
    %v758 = vsel %vm532, %v754, %v757
    %760 = vmatprep.subr.mxu0 %v252
    %761 = vmatpush1.msra.mxu0 %v251
    %762 = vmatprep.subr.mxu0 %v256
    %763 = vmatpush1.msra.mxu0 %v255
    %764 = vmatprep.subr.mxu0 %v260
    %765 = vmatpush1.msra.mxu0 %v259
    %766 = vmatprep.subr.mxu0 %v264
    %767 = vmatpush1.msra.mxu0 %v263
    %768 = vmatprep.subr.mxu0 %v268
    %769 = vmatpush1.msra.mxu0 %v267
    %770 = vmatprep.subr.mxu0 %v272
    %771 = vmatpush1.msra.mxu0 %v271
    %772 = vmatprep.subr.mxu0 %v276
    %773 = vmatpush1.msra.mxu0 %v275
    %774 = vmatprep.subr.mxu0 %v280
    %775 = vmatpush1.msra.mxu0 %v279
    %776 = vmatprep.subr.mxu0 %v284
    %777 = vmatpush1.msra.mxu0 %v283
    %778 = vmatprep.subr.mxu0 %v288
    %779 = vmatpush1.msra.mxu0 %v287
    %780 = vmatprep.subr.mxu0 %v292
    %781 = vmatpush1.msra.mxu0 %v291
    %782 = vmatprep.subr.mxu0 %v296
    %783 = vmatpush1.msra.mxu0 %v295
    %784 = vmatprep.subr.mxu0 %v300
    %785 = vmatpush1.msra.mxu0 %v299
    %786 = vmatprep.subr.mxu0 %v304
    %787 = vmatpush1.msra.mxu0 %v303
    %788 = vmatprep.subr.mxu0 %v308
    %789 = vmatpush1.msra.mxu0 %v307
    %790 = vmatprep.subr.mxu0 %v312
    %791 = vmatpush1.msra.mxu0 %v311
    %792 = vmatprep.subr.mxu0 0.0
    %793 = vmatpush1.msra.mxu0 0.0
    %794 = vmatprep.subr.mxu0 0.0
    %795 = vmatpush1.msra.mxu0 0.0
    %796 = vmatprep.subr.mxu0 0.0
    %797 = vmatpush1.msra.mxu0 0.0
    %798 = vmatprep.subr.mxu0 0.0
    %799 = vmatpush1.msra.mxu0 0.0
    %800 = vmatprep.subr.mxu0 0.0
    %801 = vmatpush1.msra.mxu0 0.0
    %802 = vmatprep.subr.mxu0 0.0
    %803 = vmatpush1.msra.mxu0 0.0
    %804 = vmatprep.subr.mxu0 0.0
    %805 = vmatpush1.msra.mxu0 0.0
    %806 = vmatprep.subr.mxu0 0.0
    %807 = vmatpush1.msra.mxu0 0.0
    %808 = vmatprep.subr.mxu0 0.0
    %809 = vmatpush1.msra.mxu0 0.0
    %810 = vmatprep.subr.mxu0 0.0
    %811 = vmatpush1.msra.mxu0 0.0
    %812 = vmatprep.subr.mxu0 0.0
    %813 = vmatpush1.msra.mxu0 0.0
    %814 = vmatprep.subr.mxu0 0.0
    %815 = vmatpush1.msra.mxu0 0.0
    %816 = vmatprep.subr.mxu0 0.0
    %817 = vmatpush1.msra.mxu0 0.0
    %818 = vmatprep.subr.mxu0 0.0
    %819 = vmatpush1.msra.mxu0 0.0
    %820 = vmatprep.subr.mxu0 0.0
    %821 = vmatpush1.msra.mxu0 0.0
    %822 = vmatprep.subr.mxu0 0.0
    %823 = vmatpush1.msra.mxu0 0.0
    %824 = vmatprep.mubr.f32.mxu0 0.0
    %825 = vmatmul.mubr.f32.gmra.mrb[0].mxu0 %v758
    %v826 = vpop.f32.mrb[0].mxu0
    %v827 = vadd.f32 0.0, %v826
    %v828 = vpop.f32.mrb[0].mxu0
    %v829 = vadd.f32 0.0, %v828
    %830 = vdwg.mxu0
    %831 = vmatprep.subr.mxu0 %v254
    %832 = vmatpush1.msra.mxu0 %v253
    %833 = vmatprep.subr.mxu0 %v258
    %834 = vmatpush1.msra.mxu0 %v257
    %835 = vmatprep.subr.mxu0 %v262
    %836 = vmatpush1.msra.mxu0 %v261
    %837 = vmatprep.subr.mxu0 %v266
    %838 = vmatpush1.msra.mxu0 %v265
    %839 = vmatprep.subr.mxu0 %v270
    %840 = vmatpush1.msra.mxu0 %v269
    %841 = vmatprep.subr.mxu0 %v274
    %842 = vmatpush1.msra.mxu0 %v273
    %843 = vmatprep.subr.mxu0 %v278
    %844 = vmatpush1.msra.mxu0 %v277
    %845 = vmatprep.subr.mxu0 %v282
    %846 = vmatpush1.msra.mxu0 %v281
    %847 = vmatprep.subr.mxu0 %v286
    %848 = vmatpush1.msra.mxu0 %v285
    %849 = vmatprep.subr.mxu0 %v290
    %850 = vmatpush1.msra.mxu0 %v289
    %851 = vmatprep.subr.mxu0 %v294
    %852 = vmatpush1.msra.mxu0 %v293
    %853 = vmatprep.subr.mxu0 %v298
    %854 = vmatpush1.msra.mxu0 %v297
    %855 = vmatprep.subr.mxu0 %v302
    %856 = vmatpush1.msra.mxu0 %v301
    %857 = vmatprep.subr.mxu0 %v306
    %858 = vmatpush1.msra.mxu0 %v305
    %859 = vmatprep.subr.mxu0 %v310
    %860 = vmatpush1.msra.mxu0 %v309
    %861 = vmatprep.subr.mxu0 %v314
    %862 = vmatpush1.msra.mxu0 %v313
    %863 = vmatprep.subr.mxu0 0.0
    %864 = vmatpush1.msra.mxu0 0.0
    %865 = vmatprep.subr.mxu0 0.0
    %866 = vmatpush1.msra.mxu0 0.0
    %867 = vmatprep.subr.mxu0 0.0
    %868 = vmatpush1.msra.mxu0 0.0
    %869 = vmatprep.subr.mxu0 0.0
    %870 = vmatpush1.msra.mxu0 0.0
    %871 = vmatprep.subr.mxu0 0.0
    %872 = vmatpush1.msra.mxu0 0.0
    %873 = vmatprep.subr.mxu0 0.0
    %874 = vmatpush1.msra.mxu0 0.0
    %875 = vmatprep.subr.mxu0 0.0
    %876 = vmatpush1.msra.mxu0 0.0
    %877 = vmatprep.subr.mxu0 0.0
    %878 = vmatpush1.msra.mxu0 0.0
    %879 = vmatprep.subr.mxu0 0.0
    %880 = vmatpush1.msra.mxu0 0.0
    %881 = vmatprep.subr.mxu0 0.0
    %882 = vmatpush1.msra.mxu0 0.0
    %883 = vmatprep.subr.mxu0 0.0
    %884 = vmatpush1.msra.mxu0 0.0
    %885 = vmatprep.subr.mxu0 0.0
    %886 = vmatpush1.msra.mxu0 0.0
    %887 = vmatprep.subr.mxu0 0.0
    %888 = vmatpush1.msra.mxu0 0.0
    %889 = vmatprep.subr.mxu0 0.0
    %890 = vmatpush1.msra.mxu0 0.0
    %891 = vmatprep.subr.mxu0 0.0
    %892 = vmatpush1.msra.mxu0 0.0
    %893 = vmatprep.subr.mxu0 0.0
    %894 = vmatpush1.msra.mxu0 0.0
    %895 = vmatprep.mubr.f32.mxu0 0.0
    %896 = vmatmul.mubr.f32.gmra.mrb[0].mxu0 %v758
    %v897 = vpop.f32.mrb[0].mxu0
    %v898 = vadd.f32 0.0, %v897
    %v899 = vpop.f32.mrb[0].mxu0
    %v900 = vadd.f32 0.0, %v899
    %901 = vdwg.mxu0
    %v906 = vrot.slane %v827, 6
    %v907 = vrot.slane %v829, 6
    %v908 = vrot.slane %v898, 6
    %v909 = vrot.slane %v900, 6
    %v910 = vrot.slane %v827, 7
    %v911 = vrot.slane %v829, 7
    %v912 = vrot.slane %v898, 7
    %v913 = vrot.slane %v900, 7
    %v922 = vadd.f32 %v164, %v906
    %v923 = vadd.f32 %v166, %v907
    %v924 = vadd.f32 %v241, %v908
    %v925 = vadd.f32 %v243, %v909
    %v926 = vadd.f32 %v170, %v910
    %v927 = vadd.f32 %v172, %v911
    %v928 = vadd.f32 %v247, %v912
    %v929 = vadd.f32 %v249, %v913
    %v930 = vxor.u32 %v922, 2147483648
    %v931 = vxor.u32 %v926, 2147483648
    %v932 = vmul.f32 %v930, 1.442695
    %v933 = vpow.pop %v932
    %v934 = vmul.f32 %v931, 1.442695
    %v935 = vpow.pop %v934
    %v936 = vadd.f32 %v933, 1.0
    %v937 = vadd.f32 %v935, 1.0
    %v938 = vrcp.pop %v936
    %v939 = vmul.f32 1.0, %v938
    %v940 = vrcp.pop %v937
    %v941 = vmul.f32 1.0, %v940
    %v942 = vxor.u32 %v923, 2147483648
    %v943 = vxor.u32 %v927, 2147483648
    %v944 = vmul.f32 %v942, 1.442695
    %v945 = vpow.pop %v944
    %v946 = vmul.f32 %v943, 1.442695
    %v947 = vpow.pop %v946
    %v948 = vadd.f32 %v945, 1.0
    %v949 = vadd.f32 %v947, 1.0
    %v950 = vrcp.pop %v948
    %v951 = vmul.f32 1.0, %v950
    %v952 = vrcp.pop %v949
    %v953 = vmul.f32 1.0, %v952
    %v954 = vtanh.pop %v924
    %v955 = vtanh.pop %v928
    %v956 = vxor.u32 %v925, 2147483648
    %v957 = vxor.u32 %v929, 2147483648
    %v958 = vmul.f32 %v956, 1.442695
    %v959 = vpow.pop %v958
    %v960 = vmul.f32 %v957, 1.442695
    %v961 = vpow.pop %v960
    %v962 = vadd.f32 %v959, 1.0
    %v963 = vadd.f32 %v961, 1.0
    %v964 = vrcp.pop %v962
    %v965 = vmul.f32 1.0, %v964
    %v966 = vrcp.pop %v963
    %v967 = vmul.f32 1.0, %v966
    %v970 = vrot.slane %v749, 7
    %v971 = vrot.slane %v750, 7
    %v974 = vmul.f32 %v951, %v970
    %v975 = vmul.f32 %v953, %v971
    %v976 = vmul.f32 %v939, %v954
    %v977 = vmul.f32 %v941, %v955
    %v978 = vadd.f32 %v974, %v976
    %v979 = vadd.f32 %v975, %v977
    %v980 = vtanh.pop %v978
    %v981 = vtanh.pop %v979
    %v982 = vmul.f32 %v965, %v980
    %v983 = vmul.f32 %v967, %v981
    %v986 = vrot.slane %v982, 2
    %v987 = vrot.slane %v983, 1
    %v988 = vsel %vm532, %v987, %v986
    %990 = vmatprep.subr.mxu0 %v252
    %991 = vmatpush1.msra.mxu0 %v251
    %992 = vmatprep.subr.mxu0 %v256
    %993 = vmatpush1.msra.mxu0 %v255
    %994 = vmatprep.subr.mxu0 %v260
    %995 = vmatpush1.msra.mxu0 %v259
    %996 = vmatprep.subr.mxu0 %v264
    %997 = vmatpush1.msra.mxu0 %v263
    %998 = vmatprep.subr.mxu0 %v268
    %999 = vmatpush1.msra.mxu0 %v267
    %1000 = vmatprep.subr.mxu0 %v272
    %1001 = vmatpush1.msra.mxu0 %v271
    %1002 = vmatprep.subr.mxu0 %v276
    %1003 = vmatpush1.msra.mxu0 %v275
    %1004 = vmatprep.subr.mxu0 %v280
    %1005 = vmatpush1.msra.mxu0 %v279
    %1006 = vmatprep.subr.mxu0 %v284
    %1007 = vmatpush1.msra.mxu0 %v283
    %1008 = vmatprep.subr.mxu0 %v288
    %1009 = vmatpush1.msra.mxu0 %v287
    %1010 = vmatprep.subr.mxu0 %v292
    %1011 = vmatpush1.msra.mxu0 %v291
    %1012 = vmatprep.subr.mxu0 %v296
    %1013 = vmatpush1.msra.mxu0 %v295
    %1014 = vmatprep.subr.mxu0 %v300
    %1015 = vmatpush1.msra.mxu0 %v299
    %1016 = vmatprep.subr.mxu0 %v304
    %1017 = vmatpush1.msra.mxu0 %v303
    %1018 = vmatprep.subr.mxu0 %v308
    %1019 = vmatpush1.msra.mxu0 %v307
    %1020 = vmatprep.subr.mxu0 %v312
    %1021 = vmatpush1.msra.mxu0 %v311
    %1022 = vmatprep.subr.mxu0 0.0
    %1023 = vmatpush1.msra.mxu0 0.0
    %1024 = vmatprep.subr.mxu0 0.0
    %1025 = vmatpush1.msra.mxu0 0.0
    %1026 = vmatprep.subr.mxu0 0.0
    %1027 = vmatpush1.msra.mxu0 0.0
    %1028 = vmatprep.subr.mxu0 0.0
    %1029 = vmatpush1.msra.mxu0 0.0
    %1030 = vmatprep.subr.mxu0 0.0
    %1031 = vmatpush1.msra.mxu0 0.0
    %1032 = vmatprep.subr.mxu0 0.0
    %1033 = vmatpush1.msra.mxu0 0.0
    %1034 = vmatprep.subr.mxu0 0.0
    %1035 = vmatpush1.msra.mxu0 0.0
    %1036 = vmatprep.subr.mxu0 0.0
    %1037 = vmatpush1.msra.mxu0 0.0
    %1038 = vmatprep.subr.mxu0 0.0
    %1039 = vmatpush1.msra.mxu0 0.0
    %1040 = vmatprep.subr.mxu0 0.0
    %1041 = vmatpush1.msra.mxu0 0.0
    %1042 = vmatprep.subr.mxu0 0.0
    %1043 = vmatpush1.msra.mxu0 0.0
    %1044 = vmatprep.subr.mxu0 0.0
    %1045 = vmatpush1.msra.mxu0 0.0
    %1046 = vmatprep.subr.mxu0 0.0
    %1047 = vmatpush1.msra.mxu0 0.0
    %1048 = vmatprep.subr.mxu0 0.0
    %1049 = vmatpush1.msra.mxu0 0.0
    %1050 = vmatprep.subr.mxu0 0.0
    %1051 = vmatpush1.msra.mxu0 0.0
    %1052 = vmatprep.subr.mxu0 0.0
    %1053 = vmatpush1.msra.mxu0 0.0
    %1054 = vmatprep.mubr.f32.mxu0 0.0
    %1055 = vmatmul.mubr.f32.gmra.mrb[0].mxu0 %v988
    %v1056 = vpop.f32.mrb[0].mxu0
    %v1057 = vadd.f32 0.0, %v1056
    %v1058 = vpop.f32.mrb[0].mxu0
    %v1059 = vadd.f32 0.0, %v1058
    %1060 = vdwg.mxu0
    %1061 = vmatprep.subr.mxu0 %v254
    %1062 = vmatpush1.msra.mxu0 %v253
    %1063 = vmatprep.subr.mxu0 %v258
    %1064 = vmatpush1.msra.mxu0 %v257
    %1065 = vmatprep.subr.mxu0 %v262
    %1066 = vmatpush1.msra.mxu0 %v261
    %1067 = vmatprep.subr.mxu0 %v266
    %1068 = vmatpush1.msra.mxu0 %v265
    %1069 = vmatprep.subr.mxu0 %v270
    %1070 = vmatpush1.msra.mxu0 %v269
    %1071 = vmatprep.subr.mxu0 %v274
    %1072 = vmatpush1.msra.mxu0 %v273
    %1073 = vmatprep.subr.mxu0 %v278
    %1074 = vmatpush1.msra.mxu0 %v277
    %1075 = vmatprep.subr.mxu0 %v282
    %1076 = vmatpush1.msra.mxu0 %v281
    %1077 = vmatprep.subr.mxu0 %v286
    %1078 = vmatpush1.msra.mxu0 %v285
    %1079 = vmatprep.subr.mxu0 %v290
    %1080 = vmatpush1.msra.mxu0 %v289
    %1081 = vmatprep.subr.mxu0 %v294
    %1082 = vmatpush1.msra.mxu0 %v293
    %1083 = vmatprep.subr.mxu0 %v298
    %1084 = vmatpush1.msra.mxu0 %v297
    %1085 = vmatprep.subr.mxu0 %v302
    %1086 = vmatpush1.msra.mxu0 %v301
    %1087 = vmatprep.subr.mxu0 %v306
    %1088 = vmatpush1.msra.mxu0 %v305
    %1089 = vmatprep.subr.mxu0 %v310
    %1090 = vmatpush1.msra.mxu0 %v309
    %1091 = vmatprep.subr.mxu0 %v314
    %1092 = vmatpush1.msra.mxu0 %v313
    %1093 = vmatprep.subr.mxu0 0.0
    %1094 = vmatpush1.msra.mxu0 0.0
    %1095 = vmatprep.subr.mxu0 0.0
    %1096 = vmatpush1.msra.mxu0 0.0
    %1097 = vmatprep.subr.mxu0 0.0
    %1098 = vmatpush1.msra.mxu0 0.0
    %1099 = vmatprep.subr.mxu0 0.0
    %1100 = vmatpush1.msra.mxu0 0.0
    %1101 = vmatprep.subr.mxu0 0.0
    %1102 = vmatpush1.msra.mxu0 0.0
    %1103 = vmatprep.subr.mxu0 0.0
    %1104 = vmatpush1.msra.mxu0 0.0
    %1105 = vmatprep.subr.mxu0 0.0
    %1106 = vmatpush1.msra.mxu0 0.0
    %1107 = vmatprep.subr.mxu0 0.0
    %1108 = vmatpush1.msra.mxu0 0.0
    %1109 = vmatprep.subr.mxu0 0.0
    %1110 = vmatpush1.msra.mxu0 0.0
    %1111 = vmatprep.subr.mxu0 0.0
    %1112 = vmatpush1.msra.mxu0 0.0
    %1113 = vmatprep.subr.mxu0 0.0
    %1114 = vmatpush1.msra.mxu0 0.0
    %1115 = vmatprep.subr.mxu0 0.0
    %1116 = vmatpush1.msra.mxu0 0.0
    %1117 = vmatprep.subr.mxu0 0.0
    %1118 = vmatpush1.msra.mxu0 0.0
    %1119 = vmatprep.subr.mxu0 0.0
    %1120 = vmatpush1.msra.mxu0 0.0
    %1121 = vmatprep.subr.mxu0 0.0
    %1122 = vmatpush1.msra.mxu0 0.0
    %1123 = vmatprep.subr.mxu0 0.0
    %1124 = vmatpush1.msra.mxu0 0.0
    %1125 = vmatprep.mubr.f32.mxu0 0.0
    %1126 = vmatmul.mubr.f32.gmra.mrb[0].mxu0 %v988
    %v1127 = vpop.f32.mrb[0].mxu0
    %v1128 = vadd.f32 0.0, %v1127
    %v1129 = vpop.f32.mrb[0].mxu0
    %v1130 = vadd.f32 0.0, %v1129
    %1131 = vdwg.mxu0
    %v1136 = vrot.slane %v1057, 5
    %v1137 = vrot.slane %v1059, 5
    %v1138 = vrot.slane %v1128, 5
    %v1139 = vrot.slane %v1130, 5
    %v1140 = vrot.slane %v1057, 6
    %v1141 = vrot.slane %v1059, 6
    %v1142 = vrot.slane %v1128, 6
    %v1143 = vrot.slane %v1130, 6
    %v1152 = vadd.f32 %v164, %v1136
    %v1153 = vadd.f32 %v166, %v1137
    %v1154 = vadd.f32 %v241, %v1138
    %v1155 = vadd.f32 %v243, %v1139
    %v1156 = vadd.f32 %v170, %v1140
    %v1157 = vadd.f32 %v172, %v1141
    %v1158 = vadd.f32 %v247, %v1142
    %v1159 = vadd.f32 %v249, %v1143
    %v1160 = vxor.u32 %v1152, 2147483648
    %v1161 = vxor.u32 %v1156, 2147483648
    %v1162 = vmul.f32 %v1160, 1.442695
    %v1163 = vpow.pop %v1162
    %v1164 = vmul.f32 %v1161, 1.442695
    %v1165 = vpow.pop %v1164
    %v1166 = vadd.f32 %v1163, 1.0
    %v1167 = vadd.f32 %v1165, 1.0
    %v1168 = vrcp.pop %v1166
    %v1169 = vmul.f32 1.0, %v1168
    %v1170 = vrcp.pop %v1167
    %v1171 = vmul.f32 1.0, %v1170
    %v1172 = vxor.u32 %v1153, 2147483648
    %v1173 = vxor.u32 %v1157, 2147483648
    %v1174 = vmul.f32 %v1172, 1.442695
    %v1175 = vpow.pop %v1174
    %v1176 = vmul.f32 %v1173, 1.442695
    %v1177 = vpow.pop %v1176
    %v1178 = vadd.f32 %v1175, 1.0
    %v1179 = vadd.f32 %v1177, 1.0
    %v1180 = vrcp.pop %v1178
    %v1181 = vmul.f32 1.0, %v1180
    %v1182 = vrcp.pop %v1179
    %v1183 = vmul.f32 1.0, %v1182
    %v1184 = vtanh.pop %v1154
    %v1185 = vtanh.pop %v1158
    %v1186 = vxor.u32 %v1155, 2147483648
    %v1187 = vxor.u32 %v1159, 2147483648
    %v1188 = vmul.f32 %v1186, 1.442695
    %v1189 = vpow.pop %v1188
    %v1190 = vmul.f32 %v1187, 1.442695
    %v1191 = vpow.pop %v1190
    %v1192 = vadd.f32 %v1189, 1.0
    %v1193 = vadd.f32 %v1191, 1.0
    %v1194 = vrcp.pop %v1192
    %v1195 = vmul.f32 1.0, %v1194
    %v1196 = vrcp.pop %v1193
    %v1197 = vmul.f32 1.0, %v1196
    %v1200 = vrot.slane %v978, 7
    %v1201 = vrot.slane %v979, 7
    %v1204 = vmul.f32 %v1181, %v1200
    %v1205 = vmul.f32 %v1183, %v1201
    %v1206 = vmul.f32 %v1169, %v1184
    %v1207 = vmul.f32 %v1171, %v1185
    %v1208 = vadd.f32 %v1204, %v1206
    %v1209 = vadd.f32 %v1205, %v1207
    %v1210 = vtanh.pop %v1208
    %v1211 = vtanh.pop %v1209
    %v1212 = vmul.f32 %v1195, %v1210
    %v1213 = vmul.f32 %v1197, %v1211
    %v1216 = vrot.slane %v1212, 3
    %v1217 = vrot.slane %v1213, 2
    %v1218 = vsel %vm532, %v1217, %v1216
    %1220 = vmatprep.subr.mxu0 %v252
    %1221 = vmatpush1.msra.mxu0 %v251
    %1222 = vmatprep.subr.mxu0 %v256
    %1223 = vmatpush1.msra.mxu0 %v255
    %1224 = vmatprep.subr.mxu0 %v260
    %1225 = vmatpush1.msra.mxu0 %v259
    %1226 = vmatprep.subr.mxu0 %v264
    %1227 = vmatpush1.msra.mxu0 %v263
    %1228 = vmatprep.subr.mxu0 %v268
    %1229 = vmatpush1.msra.mxu0 %v267
    %1230 = vmatprep.subr.mxu0 %v272
    %1231 = vmatpush1.msra.mxu0 %v271
    %1232 = vmatprep.subr.mxu0 %v276
    %1233 = vmatpush1.msra.mxu0 %v275
    %1234 = vmatprep.subr.mxu0 %v280
    %1235 = vmatpush1.msra.mxu0 %v279
    %1236 = vmatprep.subr.mxu0 %v284
    %1237 = vmatpush1.msra.mxu0 %v283
    %1238 = vmatprep.subr.mxu0 %v288
    %1239 = vmatpush1.msra.mxu0 %v287
    %1240 = vmatprep.subr.mxu0 %v292
    %1241 = vmatpush1.msra.mxu0 %v291
    %1242 = vmatprep.subr.mxu0 %v296
    %1243 = vmatpush1.msra.mxu0 %v295
    %1244 = vmatprep.subr.mxu0 %v300
    %1245 = vmatpush1.msra.mxu0 %v299
    %1246 = vmatprep.subr.mxu0 %v304
    %1247 = vmatpush1.msra.mxu0 %v303
    %1248 = vmatprep.subr.mxu0 %v308
    %1249 = vmatpush1.msra.mxu0 %v307
    %1250 = vmatprep.subr.mxu0 %v312
    %1251 = vmatpush1.msra.mxu0 %v311
    %1252 = vmatprep.subr.mxu0 0.0
    %1253 = vmatpush1.msra.mxu0 0.0
    %1254 = vmatprep.subr.mxu0 0.0
    %1255 = vmatpush1.msra.mxu0 0.0
    %1256 = vmatprep.subr.mxu0 0.0
    %1257 = vmatpush1.msra.mxu0 0.0
    %1258 = vmatprep.subr.mxu0 0.0
    %1259 = vmatpush1.msra.mxu0 0.0
    %1260 = vmatprep.subr.mxu0 0.0
    %1261 = vmatpush1.msra.mxu0 0.0
    %1262 = vmatprep.subr.mxu0 0.0
    %1263 = vmatpush1.msra.mxu0 0.0
    %1264 = vmatprep.subr.mxu0 0.0
    %1265 = vmatpush1.msra.mxu0 0.0
    %1266 = vmatprep.subr.mxu0 0.0
    %1267 = vmatpush1.msra.mxu0 0.0
    %1268 = vmatprep.subr.mxu0 0.0
    %1269 = vmatpush1.msra.mxu0 0.0
    %1270 = vmatprep.subr.mxu0 0.0
    %1271 = vmatpush1.msra.mxu0 0.0
    %1272 = vmatprep.subr.mxu0 0.0
    %1273 = vmatpush1.msra.mxu0 0.0
    %1274 = vmatprep.subr.mxu0 0.0
    %1275 = vmatpush1.msra.mxu0 0.0
    %1276 = vmatprep.subr.mxu0 0.0
    %1277 = vmatpush1.msra.mxu0 0.0
    %1278 = vmatprep.subr.mxu0 0.0
    %1279 = vmatpush1.msra.mxu0 0.0
    %1280 = vmatprep.subr.mxu0 0.0
    %1281 = vmatpush1.msra.mxu0 0.0
    %1282 = vmatprep.subr.mxu0 0.0
    %1283 = vmatpush1.msra.mxu0 0.0
    %1284 = vmatprep.mubr.f32.mxu0 0.0
    %1285 = vmatmul.mubr.f32.gmra.mrb[0].mxu0 %v1218
    %v1286 = vpop.f32.mrb[0].mxu0
    %v1287 = vadd.f32 0.0, %v1286
    %v1288 = vpop.f32.mrb[0].mxu0
    %v1289 = vadd.f32 0.0, %v1288
    %1290 = vdwg.mxu0
    %1291 = vmatprep.subr.mxu0 %v254
    %1292 = vmatpush1.msra.mxu0 %v253
    %1293 = vmatprep.subr.mxu0 %v258
    %1294 = vmatpush1.msra.mxu0 %v257
    %1295 = vmatprep.subr.mxu0 %v262
    %1296 = vmatpush1.msra.mxu0 %v261
    %1297 = vmatprep.subr.mxu0 %v266
    %1298 = vmatpush1.msra.mxu0 %v265
    %1299 = vmatprep.subr.mxu0 %v270
    %1300 = vmatpush1.msra.mxu0 %v269
    %1301 = vmatprep.subr.mxu0 %v274
    %1302 = vmatpush1.msra.mxu0 %v273
    %1303 = vmatprep.subr.mxu0 %v278
    %1304 = vmatpush1.msra.mxu0 %v277
    %1305 = vmatprep.subr.mxu0 %v282
    %1306 = vmatpush1.msra.mxu0 %v281
    %1307 = vmatprep.subr.mxu0 %v286
    %1308 = vmatpush1.msra.mxu0 %v285
    %1309 = vmatprep.subr.mxu0 %v290
    %1310 = vmatpush1.msra.mxu0 %v289
    %1311 = vmatprep.subr.mxu0 %v294
    %1312 = vmatpush1.msra.mxu0 %v293
    %1313 = vmatprep.subr.mxu0 %v298
    %1314 = vmatpush1.msra.mxu0 %v297
    %1315 = vmatprep.subr.mxu0 %v302
    %1316 = vmatpush1.msra.mxu0 %v301
    %1317 = vmatprep.subr.mxu0 %v306
    %1318 = vmatpush1.msra.mxu0 %v305
    %1319 = vmatprep.subr.mxu0 %v310
    %1320 = vmatpush1.msra.mxu0 %v309
    %1321 = vmatprep.subr.mxu0 %v314
    %1322 = vmatpush1.msra.mxu0 %v313
    %1323 = vmatprep.subr.mxu0 0.0
    %1324 = vmatpush1.msra.mxu0 0.0
    %1325 = vmatprep.subr.mxu0 0.0
    %1326 = vmatpush1.msra.mxu0 0.0
    %1327 = vmatprep.subr.mxu0 0.0
    %1328 = vmatpush1.msra.mxu0 0.0
    %1329 = vmatprep.subr.mxu0 0.0
    %1330 = vmatpush1.msra.mxu0 0.0
    %1331 = vmatprep.subr.mxu0 0.0
    %1332 = vmatpush1.msra.mxu0 0.0
    %1333 = vmatprep.subr.mxu0 0.0
    %1334 = vmatpush1.msra.mxu0 0.0
    %1335 = vmatprep.subr.mxu0 0.0
    %1336 = vmatpush1.msra.mxu0 0.0
    %1337 = vmatprep.subr.mxu0 0.0
    %1338 = vmatpush1.msra.mxu0 0.0
    %1339 = vmatprep.subr.mxu0 0.0
    %1340 = vmatpush1.msra.mxu0 0.0
    %1341 = vmatprep.subr.mxu0 0.0
    %1342 = vmatpush1.msra.mxu0 0.0
    %1343 = vmatprep.subr.mxu0 0.0
    %1344 = vmatpush1.msra.mxu0 0.0
    %1345 = vmatprep.subr.mxu0 0.0
    %1346 = vmatpush1.msra.mxu0 0.0
    %1347 = vmatprep.subr.mxu0 0.0
    %1348 = vmatpush1.msra.mxu0 0.0
    %1349 = vmatprep.subr.mxu0 0.0
    %1350 = vmatpush1.msra.mxu0 0.0
    %1351 = vmatprep.subr.mxu0 0.0
    %1352 = vmatpush1.msra.mxu0 0.0
    %1353 = vmatprep.subr.mxu0 0.0
    %1354 = vmatpush1.msra.mxu0 0.0
    %1355 = vmatprep.mubr.f32.mxu0 0.0
    %1356 = vmatmul.mubr.f32.gmra.mrb[0].mxu0 %v1218
    %v1357 = vpop.f32.mrb[0].mxu0
    %v1358 = vadd.f32 0.0, %v1357
    %v1359 = vpop.f32.mrb[0].mxu0
    %v1360 = vadd.f32 0.0, %v1359
    %1361 = vdwg.mxu0
    %v1366 = vrot.slane %v1287, 4
    %v1367 = vrot.slane %v1289, 4
    %v1368 = vrot.slane %v1358, 4
    %v1369 = vrot.slane %v1360, 4
    %v1370 = vrot.slane %v1287, 5
    %v1371 = vrot.slane %v1289, 5
    %v1372 = vrot.slane %v1358, 5
    %v1373 = vrot.slane %v1360, 5
    %v1382 = vadd.f32 %v164, %v1366
    %v1383 = vadd.f32 %v166, %v1367
    %v1384 = vadd.f32 %v241, %v1368
    %v1385 = vadd.f32 %v243, %v1369
    %v1386 = vadd.f32 %v170, %v1370
    %v1387 = vadd.f32 %v172, %v1371
    %v1388 = vadd.f32 %v247, %v1372
    %v1389 = vadd.f32 %v249, %v1373
    %v1390 = vxor.u32 %v1382, 2147483648
    %v1391 = vxor.u32 %v1386, 2147483648
    %v1392 = vmul.f32 %v1390, 1.442695
    %v1393 = vpow.pop %v1392
    %v1394 = vmul.f32 %v1391, 1.442695
    %v1395 = vpow.pop %v1394
    %v1396 = vadd.f32 %v1393, 1.0
    %v1397 = vadd.f32 %v1395, 1.0
    %v1398 = vrcp.pop %v1396
    %v1399 = vmul.f32 1.0, %v1398
    %v1400 = vrcp.pop %v1397
    %v1401 = vmul.f32 1.0, %v1400
    %v1402 = vxor.u32 %v1383, 2147483648
    %v1403 = vxor.u32 %v1387, 2147483648
    %v1404 = vmul.f32 %v1402, 1.442695
    %v1405 = vpow.pop %v1404
    %v1406 = vmul.f32 %v1403, 1.442695
    %v1407 = vpow.pop %v1406
    %v1408 = vadd.f32 %v1405, 1.0
    %v1409 = vadd.f32 %v1407, 1.0
    %v1410 = vrcp.pop %v1408
    %v1411 = vmul.f32 1.0, %v1410
    %v1412 = vrcp.pop %v1409
    %v1413 = vmul.f32 1.0, %v1412
    %v1414 = vtanh.pop %v1384
    %v1415 = vtanh.pop %v1388
    %v1416 = vxor.u32 %v1385, 2147483648
    %v1417 = vxor.u32 %v1389, 2147483648
    %v1418 = vmul.f32 %v1416, 1.442695
    %v1419 = vpow.pop %v1418
    %v1420 = vmul.f32 %v1417, 1.442695
    %v1421 = vpow.pop %v1420
    %v1422 = vadd.f32 %v1419, 1.0
    %v1423 = vadd.f32 %v1421, 1.0
    %v1424 = vrcp.pop %v1422
    %v1425 = vmul.f32 1.0, %v1424
    %v1426 = vrcp.pop %v1423
    %v1427 = vmul.f32 1.0, %v1426
    %v1430 = vrot.slane %v1208, 7
    %v1431 = vrot.slane %v1209, 7
    %v1434 = vmul.f32 %v1411, %v1430
    %v1435 = vmul.f32 %v1413, %v1431
    %v1436 = vmul.f32 %v1399, %v1414
    %v1437 = vmul.f32 %v1401, %v1415
    %v1438 = vadd.f32 %v1434, %v1436
    %v1439 = vadd.f32 %v1435, %v1437
    %v1440 = vtanh.pop %v1438
    %v1441 = vtanh.pop %v1439
    %v1442 = vmul.f32 %v1425, %v1440
    %v1443 = vmul.f32 %v1427, %v1441
    %v1446 = vrot.slane %v1442, 4
    %v1447 = vrot.slane %v1443, 3
    %v1448 = vsel %vm532, %v1447, %v1446
    %1450 = vmatprep.subr.mxu0 %v252
    %1451 = vmatpush1.msra.mxu0 %v251
    %1452 = vmatprep.subr.mxu0 %v256
    %1453 = vmatpush1.msra.mxu0 %v255
    %1454 = vmatprep.subr.mxu0 %v260
    %1455 = vmatpush1.msra.mxu0 %v259
    %1456 = vmatprep.subr.mxu0 %v264
    %1457 = vmatpush1.msra.mxu0 %v263
    %1458 = vmatprep.subr.mxu0 %v268
    %1459 = vmatpush1.msra.mxu0 %v267
    %1460 = vmatprep.subr.mxu0 %v272
    %1461 = vmatpush1.msra.mxu0 %v271
    %1462 = vmatprep.subr.mxu0 %v276
    %1463 = vmatpush1.msra.mxu0 %v275
    %1464 = vmatprep.subr.mxu0 %v280
    %1465 = vmatpush1.msra.mxu0 %v279
    %1466 = vmatprep.subr.mxu0 %v284
    %1467 = vmatpush1.msra.mxu0 %v283
    %1468 = vmatprep.subr.mxu0 %v288
    %1469 = vmatpush1.msra.mxu0 %v287
    %1470 = vmatprep.subr.mxu0 %v292
    %1471 = vmatpush1.msra.mxu0 %v291
    %1472 = vmatprep.subr.mxu0 %v296
    %1473 = vmatpush1.msra.mxu0 %v295
    %1474 = vmatprep.subr.mxu0 %v300
    %1475 = vmatpush1.msra.mxu0 %v299
    %1476 = vmatprep.subr.mxu0 %v304
    %1477 = vmatpush1.msra.mxu0 %v303
    %1478 = vmatprep.subr.mxu0 %v308
    %1479 = vmatpush1.msra.mxu0 %v307
    %1480 = vmatprep.subr.mxu0 %v312
    %1481 = vmatpush1.msra.mxu0 %v311
    %1482 = vmatprep.subr.mxu0 0.0
    %1483 = vmatpush1.msra.mxu0 0.0
    %1484 = vmatprep.subr.mxu0 0.0
    %1485 = vmatpush1.msra.mxu0 0.0
    %1486 = vmatprep.subr.mxu0 0.0
    %1487 = vmatpush1.msra.mxu0 0.0
    %1488 = vmatprep.subr.mxu0 0.0
    %1489 = vmatpush1.msra.mxu0 0.0
    %1490 = vmatprep.subr.mxu0 0.0
    %1491 = vmatpush1.msra.mxu0 0.0
    %1492 = vmatprep.subr.mxu0 0.0
    %1493 = vmatpush1.msra.mxu0 0.0
    %1494 = vmatprep.subr.mxu0 0.0
    %1495 = vmatpush1.msra.mxu0 0.0
    %1496 = vmatprep.subr.mxu0 0.0
    %1497 = vmatpush1.msra.mxu0 0.0
    %1498 = vmatprep.subr.mxu0 0.0
    %1499 = vmatpush1.msra.mxu0 0.0
    %1500 = vmatprep.subr.mxu0 0.0
    %1501 = vmatpush1.msra.mxu0 0.0
    %1502 = vmatprep.subr.mxu0 0.0
    %1503 = vmatpush1.msra.mxu0 0.0
    %1504 = vmatprep.subr.mxu0 0.0
    %1505 = vmatpush1.msra.mxu0 0.0
    %1506 = vmatprep.subr.mxu0 0.0
    %1507 = vmatpush1.msra.mxu0 0.0
    %1508 = vmatprep.subr.mxu0 0.0
    %1509 = vmatpush1.msra.mxu0 0.0
    %1510 = vmatprep.subr.mxu0 0.0
    %1511 = vmatpush1.msra.mxu0 0.0
    %1512 = vmatprep.subr.mxu0 0.0
    %1513 = vmatpush1.msra.mxu0 0.0
    %1514 = vmatprep.mubr.f32.mxu0 0.0
    %1515 = vmatmul.mubr.f32.gmra.mrb[0].mxu0 %v1448
    %v1516 = vpop.f32.mrb[0].mxu0
    %v1517 = vadd.f32 0.0, %v1516
    %v1518 = vpop.f32.mrb[0].mxu0
    %v1519 = vadd.f32 0.0, %v1518
    %1520 = vdwg.mxu0
    %1521 = vmatprep.subr.mxu0 %v254
    %1522 = vmatpush1.msra.mxu0 %v253
    %1523 = vmatprep.subr.mxu0 %v258
    %1524 = vmatpush1.msra.mxu0 %v257
    %1525 = vmatprep.subr.mxu0 %v262
    %1526 = vmatpush1.msra.mxu0 %v261
    %1527 = vmatprep.subr.mxu0 %v266
    %1528 = vmatpush1.msra.mxu0 %v265
    %1529 = vmatprep.subr.mxu0 %v270
    %1530 = vmatpush1.msra.mxu0 %v269
    %1531 = vmatprep.subr.mxu0 %v274
    %1532 = vmatpush1.msra.mxu0 %v273
    %1533 = vmatprep.subr.mxu0 %v278
    %1534 = vmatpush1.msra.mxu0 %v277
    %1535 = vmatprep.subr.mxu0 %v282
    %1536 = vmatpush1.msra.mxu0 %v281
    %1537 = vmatprep.subr.mxu0 %v286
    %1538 = vmatpush1.msra.mxu0 %v285
    %1539 = vmatprep.subr.mxu0 %v290
    %1540 = vmatpush1.msra.mxu0 %v289
    %1541 = vmatprep.subr.mxu0 %v294
    %1542 = vmatpush1.msra.mxu0 %v293
    %1543 = vmatprep.subr.mxu0 %v298
    %1544 = vmatpush1.msra.mxu0 %v297
    %1545 = vmatprep.subr.mxu0 %v302
    %1546 = vmatpush1.msra.mxu0 %v301
    %1547 = vmatprep.subr.mxu0 %v306
    %1548 = vmatpush1.msra.mxu0 %v305
    %1549 = vmatprep.subr.mxu0 %v310
    %1550 = vmatpush1.msra.mxu0 %v309
    %1551 = vmatprep.subr.mxu0 %v314
    %1552 = vmatpush1.msra.mxu0 %v313
    %1553 = vmatprep.subr.mxu0 0.0
    %1554 = vmatpush1.msra.mxu0 0.0
    %1555 = vmatprep.subr.mxu0 0.0
    %1556 = vmatpush1.msra.mxu0 0.0
    %1557 = vmatprep.subr.mxu0 0.0
    %1558 = vmatpush1.msra.mxu0 0.0
    %1559 = vmatprep.subr.mxu0 0.0
    %1560 = vmatpush1.msra.mxu0 0.0
    %1561 = vmatprep.subr.mxu0 0.0
    %1562 = vmatpush1.msra.mxu0 0.0
    %1563 = vmatprep.subr.mxu0 0.0
    %1564 = vmatpush1.msra.mxu0 0.0
    %1565 = vmatprep.subr.mxu0 0.0
    %1566 = vmatpush1.msra.mxu0 0.0
    %1567 = vmatprep.subr.mxu0 0.0
    %1568 = vmatpush1.msra.mxu0 0.0
    %1569 = vmatprep.subr.mxu0 0.0
    %1570 = vmatpush1.msra.mxu0 0.0
    %1571 = vmatprep.subr.mxu0 0.0
    %1572 = vmatpush1.msra.mxu0 0.0
    %1573 = vmatprep.subr.mxu0 0.0
    %1574 = vmatpush1.msra.mxu0 0.0
    %1575 = vmatprep.subr.mxu0 0.0
    %1576 = vmatpush1.msra.mxu0 0.0
    %1577 = vmatprep.subr.mxu0 0.0
    %1578 = vmatpush1.msra.mxu0 0.0
    %1579 = vmatprep.subr.mxu0 0.0
    %1580 = vmatpush1.msra.mxu0 0.0
    %1581 = vmatprep.subr.mxu0 0.0
    %1582 = vmatpush1.msra.mxu0 0.0
    %1583 = vmatprep.subr.mxu0 0.0
    %1584 = vmatpush1.msra.mxu0 0.0
    %1585 = vmatprep.mubr.f32.mxu0 0.0
    %1586 = vmatmul.mubr.f32.gmra.mrb[0].mxu0 %v1448
    %v1587 = vpop.f32.mrb[0].mxu0
    %v1588 = vadd.f32 0.0, %v1587
    %v1589 = vpop.f32.mrb[0].mxu0
    %v1590 = vadd.f32 0.0, %v1589
    %1591 = vdwg.mxu0
    %v1596 = vrot.slane %v1517, 3
    %v1597 = vrot.slane %v1519, 3
    %v1598 = vrot.slane %v1588, 3
    %v1599 = vrot.slane %v1590, 3
    %v1600 = vrot.slane %v1517, 4
    %v1601 = vrot.slane %v1519, 4
    %v1602 = vrot.slane %v1588, 4
    %v1603 = vrot.slane %v1590, 4
    %v1612 = vadd.f32 %v164, %v1596
    %v1613 = vadd.f32 %v166, %v1597
    %v1614 = vadd.f32 %v241, %v1598
    %v1615 = vadd.f32 %v243, %v1599
    %v1616 = vadd.f32 %v170, %v1600
    %v1617 = vadd.f32 %v172, %v1601
    %v1618 = vadd.f32 %v247, %v1602
    %v1619 = vadd.f32 %v249, %v1603
    %v1620 = vxor.u32 %v1612, 2147483648
    %v1621 = vxor.u32 %v1616, 2147483648
    %v1622 = vmul.f32 %v1620, 1.442695
    %v1623 = vpow.pop %v1622
    %v1624 = vmul.f32 %v1621, 1.442695
    %v1625 = vpow.pop %v1624
    %v1626 = vadd.f32 %v1623, 1.0
    %v1627 = vadd.f32 %v1625, 1.0
    %v1628 = vrcp.pop %v1626
    %v1629 = vmul.f32 1.0, %v1628
    %v1630 = vrcp.pop %v1627
    %v1631 = vmul.f32 1.0, %v1630
    %v1632 = vxor.u32 %v1613, 2147483648
    %v1633 = vxor.u32 %v1617, 2147483648
    %v1634 = vmul.f32 %v1632, 1.442695
    %v1635 = vpow.pop %v1634
    %v1636 = vmul.f32 %v1633, 1.442695
    %v1637 = vpow.pop %v1636
    %v1638 = vadd.f32 %v1635, 1.0
    %v1639 = vadd.f32 %v1637, 1.0
    %v1640 = vrcp.pop %v1638
    %v1641 = vmul.f32 1.0, %v1640
    %v1642 = vrcp.pop %v1639
    %v1643 = vmul.f32 1.0, %v1642
    %v1644 = vtanh.pop %v1614
    %v1645 = vtanh.pop %v1618
    %v1646 = vxor.u32 %v1615, 2147483648
    %v1647 = vxor.u32 %v1619, 2147483648
    %v1648 = vmul.f32 %v1646, 1.442695
    %v1649 = vpow.pop %v1648
    %v1650 = vmul.f32 %v1647, 1.442695
    %v1651 = vpow.pop %v1650
    %v1652 = vadd.f32 %v1649, 1.0
    %v1653 = vadd.f32 %v1651, 1.0
    %v1654 = vrcp.pop %v1652
    %v1655 = vmul.f32 1.0, %v1654
    %v1656 = vrcp.pop %v1653
    %v1657 = vmul.f32 1.0, %v1656
    %v1660 = vrot.slane %v1438, 7
    %v1661 = vrot.slane %v1439, 7
    %v1664 = vmul.f32 %v1641, %v1660
    %v1665 = vmul.f32 %v1643, %v1661
    %v1666 = vmul.f32 %v1629, %v1644
    %v1667 = vmul.f32 %v1631, %v1645
    %v1668 = vadd.f32 %v1664, %v1666
    %v1669 = vadd.f32 %v1665, %v1667
    %v1670 = vtanh.pop %v1668
    %v1671 = vtanh.pop %v1669
    %v1672 = vmul.f32 %v1655, %v1670
    %v1673 = vmul.f32 %v1657, %v1671
    %v1676 = vrot.slane %v1672, 5
    %v1677 = vrot.slane %v1673, 4
    %v1678 = vsel %vm532, %v1677, %v1676
    %1680 = vmatprep.subr.mxu0 %v252
    %1681 = vmatpush1.msra.mxu0 %v251
    %1682 = vmatprep.subr.mxu0 %v256
    %1683 = vmatpush1.msra.mxu0 %v255
    %1684 = vmatprep.subr.mxu0 %v260
    %1685 = vmatpush1.msra.mxu0 %v259
    %1686 = vmatprep.subr.mxu0 %v264
    %1687 = vmatpush1.msra.mxu0 %v263
    %1688 = vmatprep.subr.mxu0 %v268
    %1689 = vmatpush1.msra.mxu0 %v267
    %1690 = vmatprep.subr.mxu0 %v272
    %1691 = vmatpush1.msra.mxu0 %v271
    %1692 = vmatprep.subr.mxu0 %v276
    %1693 = vmatpush1.msra.mxu0 %v275
    %1694 = vmatprep.subr.mxu0 %v280
    %1695 = vmatpush1.msra.mxu0 %v279
    %1696 = vmatprep.subr.mxu0 %v284
    %1697 = vmatpush1.msra.mxu0 %v283
    %1698 = vmatprep.subr.mxu0 %v288
    %1699 = vmatpush1.msra.mxu0 %v287
    %1700 = vmatprep.subr.mxu0 %v292
    %1701 = vmatpush1.msra.mxu0 %v291
    %1702 = vmatprep.subr.mxu0 %v296
    %1703 = vmatpush1.msra.mxu0 %v295
    %1704 = vmatprep.subr.mxu0 %v300
    %1705 = vmatpush1.msra.mxu0 %v299
    %1706 = vmatprep.subr.mxu0 %v304
    %1707 = vmatpush1.msra.mxu0 %v303
    %1708 = vmatprep.subr.mxu0 %v308
    %1709 = vmatpush1.msra.mxu0 %v307
    %1710 = vmatprep.subr.mxu0 %v312
    %1711 = vmatpush1.msra.mxu0 %v311
    %1712 = vmatprep.subr.mxu0 0.0
    %1713 = vmatpush1.msra.mxu0 0.0
    %1714 = vmatprep.subr.mxu0 0.0
    %1715 = vmatpush1.msra.mxu0 0.0
    %1716 = vmatprep.subr.mxu0 0.0
    %1717 = vmatpush1.msra.mxu0 0.0
    %1718 = vmatprep.subr.mxu0 0.0
    %1719 = vmatpush1.msra.mxu0 0.0
    %1720 = vmatprep.subr.mxu0 0.0
    %1721 = vmatpush1.msra.mxu0 0.0
    %1722 = vmatprep.subr.mxu0 0.0
    %1723 = vmatpush1.msra.mxu0 0.0
    %1724 = vmatprep.subr.mxu0 0.0
    %1725 = vmatpush1.msra.mxu0 0.0
    %1726 = vmatprep.subr.mxu0 0.0
    %1727 = vmatpush1.msra.mxu0 0.0
    %1728 = vmatprep.subr.mxu0 0.0
    %1729 = vmatpush1.msra.mxu0 0.0
    %1730 = vmatprep.subr.mxu0 0.0
    %1731 = vmatpush1.msra.mxu0 0.0
    %1732 = vmatprep.subr.mxu0 0.0
    %1733 = vmatpush1.msra.mxu0 0.0
    %1734 = vmatprep.subr.mxu0 0.0
    %1735 = vmatpush1.msra.mxu0 0.0
    %1736 = vmatprep.subr.mxu0 0.0
    %1737 = vmatpush1.msra.mxu0 0.0
    %1738 = vmatprep.subr.mxu0 0.0
    %1739 = vmatpush1.msra.mxu0 0.0
    %1740 = vmatprep.subr.mxu0 0.0
    %1741 = vmatpush1.msra.mxu0 0.0
    %1742 = vmatprep.subr.mxu0 0.0
    %1743 = vmatpush1.msra.mxu0 0.0
    %1744 = vmatprep.mubr.f32.mxu0 0.0
    %1745 = vmatmul.mubr.f32.gmra.mrb[0].mxu0 %v1678
    %v1746 = vpop.f32.mrb[0].mxu0
    %v1747 = vadd.f32 0.0, %v1746
    %v1748 = vpop.f32.mrb[0].mxu0
    %v1749 = vadd.f32 0.0, %v1748
    %1750 = vdwg.mxu0
    %1751 = vmatprep.subr.mxu0 %v254
    %1752 = vmatpush1.msra.mxu0 %v253
    %1753 = vmatprep.subr.mxu0 %v258
    %1754 = vmatpush1.msra.mxu0 %v257
    %1755 = vmatprep.subr.mxu0 %v262
    %1756 = vmatpush1.msra.mxu0 %v261
    %1757 = vmatprep.subr.mxu0 %v266
    %1758 = vmatpush1.msra.mxu0 %v265
    %1759 = vmatprep.subr.mxu0 %v270
    %1760 = vmatpush1.msra.mxu0 %v269
    %1761 = vmatprep.subr.mxu0 %v274
    %1762 = vmatpush1.msra.mxu0 %v273
    %1763 = vmatprep.subr.mxu0 %v278
    %1764 = vmatpush1.msra.mxu0 %v277
    %1765 = vmatprep.subr.mxu0 %v282
    %1766 = vmatpush1.msra.mxu0 %v281
    %1767 = vmatprep.subr.mxu0 %v286
    %1768 = vmatpush1.msra.mxu0 %v285
    %1769 = vmatprep.subr.mxu0 %v290
    %1770 = vmatpush1.msra.mxu0 %v289
    %1771 = vmatprep.subr.mxu0 %v294
    %1772 = vmatpush1.msra.mxu0 %v293
    %1773 = vmatprep.subr.mxu0 %v298
    %1774 = vmatpush1.msra.mxu0 %v297
    %1775 = vmatprep.subr.mxu0 %v302
    %1776 = vmatpush1.msra.mxu0 %v301
    %1777 = vmatprep.subr.mxu0 %v306
    %1778 = vmatpush1.msra.mxu0 %v305
    %1779 = vmatprep.subr.mxu0 %v310
    %1780 = vmatpush1.msra.mxu0 %v309
    %1781 = vmatprep.subr.mxu0 %v314
    %1782 = vmatpush1.msra.mxu0 %v313
    %1783 = vmatprep.subr.mxu0 0.0
    %1784 = vmatpush1.msra.mxu0 0.0
    %1785 = vmatprep.subr.mxu0 0.0
    %1786 = vmatpush1.msra.mxu0 0.0
    %1787 = vmatprep.subr.mxu0 0.0
    %1788 = vmatpush1.msra.mxu0 0.0
    %1789 = vmatprep.subr.mxu0 0.0
    %1790 = vmatpush1.msra.mxu0 0.0
    %1791 = vmatprep.subr.mxu0 0.0
    %1792 = vmatpush1.msra.mxu0 0.0
    %1793 = vmatprep.subr.mxu0 0.0
    %1794 = vmatpush1.msra.mxu0 0.0
    %1795 = vmatprep.subr.mxu0 0.0
    %1796 = vmatpush1.msra.mxu0 0.0
    %1797 = vmatprep.subr.mxu0 0.0
    %1798 = vmatpush1.msra.mxu0 0.0
    %1799 = vmatprep.subr.mxu0 0.0
    %1800 = vmatpush1.msra.mxu0 0.0
    %1801 = vmatprep.subr.mxu0 0.0
    %1802 = vmatpush1.msra.mxu0 0.0
    %1803 = vmatprep.subr.mxu0 0.0
    %1804 = vmatpush1.msra.mxu0 0.0
    %1805 = vmatprep.subr.mxu0 0.0
    %1806 = vmatpush1.msra.mxu0 0.0
    %1807 = vmatprep.subr.mxu0 0.0
    %1808 = vmatpush1.msra.mxu0 0.0
    %1809 = vmatprep.subr.mxu0 0.0
    %1810 = vmatpush1.msra.mxu0 0.0
    %1811 = vmatprep.subr.mxu0 0.0
    %1812 = vmatpush1.msra.mxu0 0.0
    %1813 = vmatprep.subr.mxu0 0.0
    %1814 = vmatpush1.msra.mxu0 0.0
    %1815 = vmatprep.mubr.f32.mxu0 0.0
    %1816 = vmatmul.mubr.f32.gmra.mrb[0].mxu0 %v1678
    %v1817 = vpop.f32.mrb[0].mxu0
    %v1818 = vadd.f32 0.0, %v1817
    %v1819 = vpop.f32.mrb[0].mxu0
    %v1820 = vadd.f32 0.0, %v1819
    %1821 = vdwg.mxu0
    %v1826 = vrot.slane %v1747, 2
    %v1827 = vrot.slane %v1749, 2
    %v1828 = vrot.slane %v1818, 2
    %v1829 = vrot.slane %v1820, 2
    %v1830 = vrot.slane %v1747, 3
    %v1831 = vrot.slane %v1749, 3
    %v1832 = vrot.slane %v1818, 3
    %v1833 = vrot.slane %v1820, 3
    %v1842 = vadd.f32 %v164, %v1826
    %v1843 = vadd.f32 %v166, %v1827
    %v1844 = vadd.f32 %v241, %v1828
    %v1845 = vadd.f32 %v243, %v1829
    %v1846 = vadd.f32 %v170, %v1830
    %v1847 = vadd.f32 %v172, %v1831
    %v1848 = vadd.f32 %v247, %v1832
    %v1849 = vadd.f32 %v249, %v1833
    %v1850 = vxor.u32 %v1842, 2147483648
    %v1851 = vxor.u32 %v1846, 2147483648
    %v1852 = vmul.f32 %v1850, 1.442695
    %v1853 = vpow.pop %v1852
    %v1854 = vmul.f32 %v1851, 1.442695
    %v1855 = vpow.pop %v1854
    %v1856 = vadd.f32 %v1853, 1.0
    %v1857 = vadd.f32 %v1855, 1.0
    %v1858 = vrcp.pop %v1856
    %v1859 = vmul.f32 1.0, %v1858
    %v1860 = vrcp.pop %v1857
    %v1861 = vmul.f32 1.0, %v1860
    %v1862 = vxor.u32 %v1843, 2147483648
    %v1863 = vxor.u32 %v1847, 2147483648
    %v1864 = vmul.f32 %v1862, 1.442695
    %v1865 = vpow.pop %v1864
    %v1866 = vmul.f32 %v1863, 1.442695
    %v1867 = vpow.pop %v1866
    %v1868 = vadd.f32 %v1865, 1.0
    %v1869 = vadd.f32 %v1867, 1.0
    %v1870 = vrcp.pop %v1868
    %v1871 = vmul.f32 1.0, %v1870
    %v1872 = vrcp.pop %v1869
    %v1873 = vmul.f32 1.0, %v1872
    %v1874 = vtanh.pop %v1844
    %v1875 = vtanh.pop %v1848
    %v1876 = vxor.u32 %v1845, 2147483648
    %v1877 = vxor.u32 %v1849, 2147483648
    %v1878 = vmul.f32 %v1876, 1.442695
    %v1879 = vpow.pop %v1878
    %v1880 = vmul.f32 %v1877, 1.442695
    %v1881 = vpow.pop %v1880
    %v1882 = vadd.f32 %v1879, 1.0
    %v1883 = vadd.f32 %v1881, 1.0
    %v1884 = vrcp.pop %v1882
    %v1885 = vmul.f32 1.0, %v1884
    %v1886 = vrcp.pop %v1883
    %v1887 = vmul.f32 1.0, %v1886
    %v1890 = vrot.slane %v1668, 7
    %v1891 = vrot.slane %v1669, 7
    %v1894 = vmul.f32 %v1871, %v1890
    %v1895 = vmul.f32 %v1873, %v1891
    %v1896 = vmul.f32 %v1859, %v1874
    %v1897 = vmul.f32 %v1861, %v1875
    %v1898 = vadd.f32 %v1894, %v1896
    %v1899 = vadd.f32 %v1895, %v1897
    %v1900 = vtanh.pop %v1898
    %v1901 = vtanh.pop %v1899
    %v1902 = vmul.f32 %v1885, %v1900
    %v1903 = vmul.f32 %v1887, %v1901
    %v1906 = vrot.slane %v1902, 6
    %v1907 = vrot.slane %v1903, 5
    %v1908 = vsel %vm532, %v1907, %v1906
    %1910 = vmatprep.subr.mxu0 %v252
    %1911 = vmatpush1.msra.mxu0 %v251
    %1912 = vmatprep.subr.mxu0 %v256
    %1913 = vmatpush1.msra.mxu0 %v255
    %1914 = vmatprep.subr.mxu0 %v260
    %1915 = vmatpush1.msra.mxu0 %v259
    %1916 = vmatprep.subr.mxu0 %v264
    %1917 = vmatpush1.msra.mxu0 %v263
    %1918 = vmatprep.subr.mxu0 %v268
    %1919 = vmatpush1.msra.mxu0 %v267
    %1920 = vmatprep.subr.mxu0 %v272
    %1921 = vmatpush1.msra.mxu0 %v271
    %1922 = vmatprep.subr.mxu0 %v276
    %1923 = vmatpush1.msra.mxu0 %v275
    %1924 = vmatprep.subr.mxu0 %v280
    %1925 = vmatpush1.msra.mxu0 %v279
    %1926 = vmatprep.subr.mxu0 %v284
    %1927 = vmatpush1.msra.mxu0 %v283
    %1928 = vmatprep.subr.mxu0 %v288
    %1929 = vmatpush1.msra.mxu0 %v287
    %1930 = vmatprep.subr.mxu0 %v292
    %1931 = vmatpush1.msra.mxu0 %v291
    %1932 = vmatprep.subr.mxu0 %v296
    %1933 = vmatpush1.msra.mxu0 %v295
    %1934 = vmatprep.subr.mxu0 %v300
    %1935 = vmatpush1.msra.mxu0 %v299
    %1936 = vmatprep.subr.mxu0 %v304
    %1937 = vmatpush1.msra.mxu0 %v303
    %1938 = vmatprep.subr.mxu0 %v308
    %1939 = vmatpush1.msra.mxu0 %v307
    %1940 = vmatprep.subr.mxu0 %v312
    %1941 = vmatpush1.msra.mxu0 %v311
    %1942 = vmatprep.subr.mxu0 0.0
    %1943 = vmatpush1.msra.mxu0 0.0
    %1944 = vmatprep.subr.mxu0 0.0
    %1945 = vmatpush1.msra.mxu0 0.0
    %1946 = vmatprep.subr.mxu0 0.0
    %1947 = vmatpush1.msra.mxu0 0.0
    %1948 = vmatprep.subr.mxu0 0.0
    %1949 = vmatpush1.msra.mxu0 0.0
    %1950 = vmatprep.subr.mxu0 0.0
    %1951 = vmatpush1.msra.mxu0 0.0
    %1952 = vmatprep.subr.mxu0 0.0
    %1953 = vmatpush1.msra.mxu0 0.0
    %1954 = vmatprep.subr.mxu0 0.0
    %1955 = vmatpush1.msra.mxu0 0.0
    %1956 = vmatprep.subr.mxu0 0.0
    %1957 = vmatpush1.msra.mxu0 0.0
    %1958 = vmatprep.subr.mxu0 0.0
    %1959 = vmatpush1.msra.mxu0 0.0
    %1960 = vmatprep.subr.mxu0 0.0
    %1961 = vmatpush1.msra.mxu0 0.0
    %1962 = vmatprep.subr.mxu0 0.0
    %1963 = vmatpush1.msra.mxu0 0.0
    %1964 = vmatprep.subr.mxu0 0.0
    %1965 = vmatpush1.msra.mxu0 0.0
    %1966 = vmatprep.subr.mxu0 0.0
    %1967 = vmatpush1.msra.mxu0 0.0
    %1968 = vmatprep.subr.mxu0 0.0
    %1969 = vmatpush1.msra.mxu0 0.0
    %1970 = vmatprep.subr.mxu0 0.0
    %1971 = vmatpush1.msra.mxu0 0.0
    %1972 = vmatprep.subr.mxu0 0.0
    %1973 = vmatpush1.msra.mxu0 0.0
    %1974 = vmatprep.mubr.f32.mxu0 0.0
    %1975 = vmatmul.mubr.f32.gmra.mrb[0].mxu0 %v1908
    %v1976 = vpop.f32.mrb[0].mxu0
    %v1977 = vadd.f32 0.0, %v1976
    %v1978 = vpop.f32.mrb[0].mxu0
    %v1979 = vadd.f32 0.0, %v1978
    %1980 = vdwg.mxu0
    %1981 = vmatprep.subr.mxu0 %v254
    %1982 = vmatpush1.msra.mxu0 %v253
    %1983 = vmatprep.subr.mxu0 %v258
    %1984 = vmatpush1.msra.mxu0 %v257
    %1985 = vmatprep.subr.mxu0 %v262
    %1986 = vmatpush1.msra.mxu0 %v261
    %1987 = vmatprep.subr.mxu0 %v266
    %1988 = vmatpush1.msra.mxu0 %v265
    %1989 = vmatprep.subr.mxu0 %v270
    %1990 = vmatpush1.msra.mxu0 %v269
    %1991 = vmatprep.subr.mxu0 %v274
    %1992 = vmatpush1.msra.mxu0 %v273
    %1993 = vmatprep.subr.mxu0 %v278
    %1994 = vmatpush1.msra.mxu0 %v277
    %1995 = vmatprep.subr.mxu0 %v282
    %1996 = vmatpush1.msra.mxu0 %v281
    %1997 = vmatprep.subr.mxu0 %v286
    %1998 = vmatpush1.msra.mxu0 %v285
    %1999 = vmatprep.subr.mxu0 %v290
    %2000 = vmatpush1.msra.mxu0 %v289
    %2001 = vmatprep.subr.mxu0 %v294
    %2002 = vmatpush1.msra.mxu0 %v293
    %2003 = vmatprep.subr.mxu0 %v298
    %2004 = vmatpush1.msra.mxu0 %v297
    %2005 = vmatprep.subr.mxu0 %v302
    %2006 = vmatpush1.msra.mxu0 %v301
    %2007 = vmatprep.subr.mxu0 %v306
    %2008 = vmatpush1.msra.mxu0 %v305
    %2009 = vmatprep.subr.mxu0 %v310
    %2010 = vmatpush1.msra.mxu0 %v309
    %2011 = vmatprep.subr.mxu0 %v314
    %2012 = vmatpush1.msra.mxu0 %v313
    %2013 = vmatprep.subr.mxu0 0.0
    %2014 = vmatpush1.msra.mxu0 0.0
    %2015 = vmatprep.subr.mxu0 0.0
    %2016 = vmatpush1.msra.mxu0 0.0
    %2017 = vmatprep.subr.mxu0 0.0
    %2018 = vmatpush1.msra.mxu0 0.0
    %2019 = vmatprep.subr.mxu0 0.0
    %2020 = vmatpush1.msra.mxu0 0.0
    %2021 = vmatprep.subr.mxu0 0.0
    %2022 = vmatpush1.msra.mxu0 0.0
    %2023 = vmatprep.subr.mxu0 0.0
    %2024 = vmatpush1.msra.mxu0 0.0
    %2025 = vmatprep.subr.mxu0 0.0
    %2026 = vmatpush1.msra.mxu0 0.0
    %2027 = vmatprep.subr.mxu0 0.0
    %2028 = vmatpush1.msra.mxu0 0.0
    %2029 = vmatprep.subr.mxu0 0.0
    %2030 = vmatpush1.msra.mxu0 0.0
    %2031 = vmatprep.subr.mxu0 0.0
    %2032 = vmatpush1.msra.mxu0 0.0
    %2033 = vmatprep.subr.mxu0 0.0
    %2034 = vmatpush1.msra.mxu0 0.0
    %2035 = vmatprep.subr.mxu0 0.0
    %2036 = vmatpush1.msra.mxu0 0.0
    %2037 = vmatprep.subr.mxu0 0.0
    %2038 = vmatpush1.msra.mxu0 0.0
    %2039 = vmatprep.subr.mxu0 0.0
    %2040 = vmatpush1.msra.mxu0 0.0
    %2041 = vmatprep.subr.mxu0 0.0
    %2042 = vmatpush1.msra.mxu0 0.0
    %2043 = vmatprep.subr.mxu0 0.0
    %2044 = vmatpush1.msra.mxu0 0.0
    %2045 = vmatprep.mubr.f32.mxu0 0.0
    %2046 = vmatmul.mubr.f32.gmra.mrb[0].mxu0 %v1908
    %v2047 = vpop.f32.mrb[0].mxu0
    %v2048 = vadd.f32 0.0, %v2047
    %v2049 = vpop.f32.mrb[0].mxu0
    %v2050 = vadd.f32 0.0, %v2049
    %2051 = vdwg.mxu0
    %v2056 = vrot.slane %v1977, 1
    %v2057 = vrot.slane %v1979, 1
    %v2058 = vrot.slane %v2048, 1
    %v2059 = vrot.slane %v2050, 1
    %v2060 = vrot.slane %v1977, 2
    %v2061 = vrot.slane %v1979, 2
    %v2062 = vrot.slane %v2048, 2
    %v2063 = vrot.slane %v2050, 2
    %v2072 = vadd.f32 %v164, %v2056
    %v2073 = vadd.f32 %v166, %v2057
    %v2074 = vadd.f32 %v241, %v2058
    %v2075 = vadd.f32 %v243, %v2059
    %v2076 = vadd.f32 %v170, %v2060
    %v2077 = vadd.f32 %v172, %v2061
    %v2078 = vadd.f32 %v247, %v2062
    %v2079 = vadd.f32 %v249, %v2063
    %v2080 = vxor.u32 %v2072, 2147483648
    %v2081 = vxor.u32 %v2076, 2147483648
    %v2082 = vmul.f32 %v2080, 1.442695
    %v2083 = vpow.pop %v2082
    %v2084 = vmul.f32 %v2081, 1.442695
    %v2085 = vpow.pop %v2084
    %v2086 = vadd.f32 %v2083, 1.0
    %v2087 = vadd.f32 %v2085, 1.0
    %v2088 = vrcp.pop %v2086
    %v2089 = vmul.f32 1.0, %v2088
    %v2090 = vrcp.pop %v2087
    %v2091 = vmul.f32 1.0, %v2090
    %v2092 = vxor.u32 %v2073, 2147483648
    %v2093 = vxor.u32 %v2077, 2147483648
    %v2094 = vmul.f32 %v2092, 1.442695
    %v2095 = vpow.pop %v2094
    %v2096 = vmul.f32 %v2093, 1.442695
    %v2097 = vpow.pop %v2096
    %v2098 = vadd.f32 %v2095, 1.0
    %v2099 = vadd.f32 %v2097, 1.0
    %v2100 = vrcp.pop %v2098
    %v2101 = vmul.f32 1.0, %v2100
    %v2102 = vrcp.pop %v2099
    %v2103 = vmul.f32 1.0, %v2102
    %v2104 = vtanh.pop %v2074
    %v2105 = vtanh.pop %v2078
    %v2106 = vxor.u32 %v2075, 2147483648
    %v2107 = vxor.u32 %v2079, 2147483648
    %v2108 = vmul.f32 %v2106, 1.442695
    %v2109 = vpow.pop %v2108
    %v2110 = vmul.f32 %v2107, 1.442695
    %v2111 = vpow.pop %v2110
    %v2112 = vadd.f32 %v2109, 1.0
    %v2113 = vadd.f32 %v2111, 1.0
    %v2114 = vrcp.pop %v2112
    %v2115 = vmul.f32 1.0, %v2114
    %v2116 = vrcp.pop %v2113
    %v2117 = vmul.f32 1.0, %v2116
    %v2120 = vrot.slane %v1898, 7
    %v2121 = vrot.slane %v1899, 7
    %v2124 = vmul.f32 %v2101, %v2120
    %v2125 = vmul.f32 %v2103, %v2121
    %v2126 = vmul.f32 %v2089, %v2104
    %v2127 = vmul.f32 %v2091, %v2105
    %v2128 = vadd.f32 %v2124, %v2126
    %v2129 = vadd.f32 %v2125, %v2127
    %v2130 = vtanh.pop %v2128
    %v2131 = vtanh.pop %v2129
    %v2132 = vmul.f32 %v2115, %v2130
    %v2133 = vmul.f32 %v2117, %v2131
    %v2134 = vld [vmem:[%s4] sm:$0xff]
    %v2135 = vld [vmem:[%s4 + $0x8] sm:$0xff]
    %v2136 = vld [vmem:[%s4 + $0x10] sm:$0xff]
    %v2137 = vld [vmem:[%s4 + $0x18] sm:$0xff]
    %v2138 = vld [vmem:[%s4 + $0x20] sm:$0xff]
    %v2139 = vld [vmem:[%s4 + $0x28] sm:$0xff]
    %v2140 = vld [vmem:[%s4 + $0x30] sm:$0xff]
    %v2141 = vld [vmem:[%s4 + $0x38] sm:$0xff]
    %v2142 = vld [vmem:[%s4 + $0x40] sm:$0xff]
    %v2143 = vld [vmem:[%s4 + $0x48] sm:$0xff]
    %v2144 = vld [vmem:[%s4 + $0x50] sm:$0xff]
    %v2145 = vld [vmem:[%s4 + $0x58] sm:$0xff]
    %v2146 = vld [vmem:[%s4 + $0x60] sm:$0xff]
    %v2147 = vld [vmem:[%s4 + $0x68] sm:$0xff]
    %v2148 = vld [vmem:[%s4 + $0x70] sm:$0xff]
    %v2149 = vld [vmem:[%s4 + $0x78] sm:$0xff]
    %v2150 = vld [vmem:[%s5] sm:$0x1]
    %v2152 = vlaneseq
    %v2153 = vshrl.u32 %v2152, 7
    %v2154 = vsub.s32 0, %v2153
    %v2155 = vrot.slane %v2150, %v2154
    %v2159 = vrot.slane %v2132, 7
    %v2160 = vrot.slane %v2133, 6
    %v2161 = vsel %vm532, %v2160, %v2159
    %2163 = vmatprep.subr.mxu0 0.0
    %2164 = vmatpush1.msra.mxu0 %v2134
    %2165 = vmatprep.subr.mxu0 0.0
    %2166 = vmatpush1.msra.mxu0 %v2135
    %2167 = vmatprep.subr.mxu0 0.0
    %2168 = vmatpush1.msra.mxu0 %v2136
    %2169 = vmatprep.subr.mxu0 0.0
    %2170 = vmatpush1.msra.mxu0 %v2137
    %2171 = vmatprep.subr.mxu0 0.0
    %2172 = vmatpush1.msra.mxu0 %v2138
    %2173 = vmatprep.subr.mxu0 0.0
    %2174 = vmatpush1.msra.mxu0 %v2139
    %2175 = vmatprep.subr.mxu0 0.0
    %2176 = vmatpush1.msra.mxu0 %v2140
    %2177 = vmatprep.subr.mxu0 0.0
    %2178 = vmatpush1.msra.mxu0 %v2141
    %2179 = vmatprep.subr.mxu0 0.0
    %2180 = vmatpush1.msra.mxu0 %v2142
    %2181 = vmatprep.subr.mxu0 0.0
    %2182 = vmatpush1.msra.mxu0 %v2143
    %2183 = vmatprep.subr.mxu0 0.0
    %2184 = vmatpush1.msra.mxu0 %v2144
    %2185 = vmatprep.subr.mxu0 0.0
    %2186 = vmatpush1.msra.mxu0 %v2145
    %2187 = vmatprep.subr.mxu0 0.0
    %2188 = vmatpush1.msra.mxu0 %v2146
    %2189 = vmatprep.subr.mxu0 0.0
    %2190 = vmatpush1.msra.mxu0 %v2147
    %2191 = vmatprep.subr.mxu0 0.0
    %2192 = vmatpush1.msra.mxu0 %v2148
    %2193 = vmatprep.subr.mxu0 0.0
    %2194 = vmatpush1.msra.mxu0 %v2149
    %2195 = vmatprep.subr.mxu0 0.0
    %2196 = vmatpush1.msra.mxu0 0.0
    %2197 = vmatprep.subr.mxu0 0.0
    %2198 = vmatpush1.msra.mxu0 0.0
    %2199 = vmatprep.subr.mxu0 0.0
    %2200 = vmatpush1.msra.mxu0 0.0
    %2201 = vmatprep.subr.mxu0 0.0
    %2202 = vmatpush1.msra.mxu0 0.0
    %2203 = vmatprep.subr.mxu0 0.0
    %2204 = vmatpush1.msra.mxu0 0.0
    %2205 = vmatprep.subr.mxu0 0.0
    %2206 = vmatpush1.msra.mxu0 0.0
    %2207 = vmatprep.subr.mxu0 0.0
    %2208 = vmatpush1.msra.mxu0 0.0
    %2209 = vmatprep.subr.mxu0 0.0
    %2210 = vmatpush1.msra.mxu0 0.0
    %2211 = vmatprep.subr.mxu0 0.0
    %2212 = vmatpush1.msra.mxu0 0.0
    %2213 = vmatprep.subr.mxu0 0.0
    %2214 = vmatpush1.msra.mxu0 0.0
    %2215 = vmatprep.subr.mxu0 0.0
    %2216 = vmatpush1.msra.mxu0 0.0
    %2217 = vmatprep.subr.mxu0 0.0
    %2218 = vmatpush1.msra.mxu0 0.0
    %2219 = vmatprep.subr.mxu0 0.0
    %2220 = vmatpush1.msra.mxu0 0.0
    %2221 = vmatprep.subr.mxu0 0.0
    %2222 = vmatpush1.msra.mxu0 0.0
    %2223 = vmatprep.subr.mxu0 0.0
    %2224 = vmatpush1.msra.mxu0 0.0
    %2225 = vmatprep.subr.mxu0 0.0
    %2226 = vmatpush1.msra.mxu0 0.0
    %2227 = vmatprep.mubr.f32.mxu0 0.0
    %2228 = vmatmul.mubr.f32.gmra.mrb[0].mxu0 %v2161
    %v2229 = vpop.f32.mrb[0].mxu0
    %v2230 = vadd.f32 %v2155, %v2229
    %v2231 = vpop.f32.mrb[0].mxu0
    %2232 = vdwg.mxu0
    %vm2233 = vcmask 74752
    %2234 = vst.msk [vmem:[#allocation5] sm:$0x3] %vm2233, %v2230
    // Predicated region
    $region30: #{tpu_custom_call.1} parent=1 // pred_check
      _
    $region31: #{tpu_custom_call.1} parent=1 // pred_check_branch
      %2236 = sbr.rel (0) target = $region33
    $region32: #{tpu_custom_call.1} parent=1 // pred_region
      %s2238 = ssub.s32 32, 32
      %2239 = vsyncadd [#allocation4], %s2238
      %s2241 = sshll.u32 [#allocation5], 4
      %s2242 = int_to_ptr.vmem [resolvable:$true] %s2241
      %2244 = dma.vmem_to_hbm [thread:$0]  %s2242, 32, %s6, [#allocation4]
    $region33: #{tpu_custom_call.1} parent=1 // pred_fallthru
      _
    // Predicated region
    $region34: #{tpu_custom_call.1} parent=1 // pred_check
      _
    $region35: #{tpu_custom_call.1} parent=1 // pred_check_branch
      %2246 = sbr.rel (0) target = $region37
    $region36: #{tpu_custom_call.1} parent=1 // pred_region
      %2247 = dma.done [#allocation4], 32
    $region37: #{tpu_custom_call.1} parent=1 // pred_fallthru
      _
    %2248 = vsyncpa [#allocation3], 1
    %2249 = vsyncpa [#allocation4], 1

</llo_original>
